<compile_context>
chip_gen: v6e
topology: v6e:2x2x1
jax: 0.10.0
libtpu: 0.0.40
codegen_flags: <defaults>
</compile_context>

<pallas_src>
import functools

import jax
import jax.numpy as jnp
import numpy as np
from jax.experimental import pallas as pl
from jax.experimental.pallas import tpu as pltpu

_VMEM_WORKSET_BUDGET = 28 * 1024 * 1024   # double-buffered working-set target
_VMEM_LIMIT_BYTES = 48 * 1024 * 1024      # raised scoped-VMEM limit


def _round_up(x, m):
    return ((x + m - 1) // m) * m


# -----------------------------------------------------------------------------
# Kernels
# -----------------------------------------------------------------------------

def _skipgram_fused_kernel(tgt_ref, ctx_ref, neg_ref, tt_ref, ct_ref, out_ref):
    """Fused-gather path.  Batch lives on the lane axis throughout.

    tgt_ref, ctx_ref : (1, TB)   int32  target / context indices
    neg_ref          : (K, TB)   int32  negative-sample indices
    tt_ref, ct_ref   : (D, V)    float  transposed tables (VMEM resident)
    out_ref          : (K+1, TB) f32    row 0 = pos score, rows 1..K = neg
    """
    d, v = tt_ref.shape
    tb = tgt_ref.shape[1]
    k_neg = neg_ref.shape[0]

    vocab_iota = jax.lax.broadcasted_iota(jnp.int32, (v, tb), 0)
    t_table = tt_ref[...].astype(jnp.float32)        # (D, V)
    c_table = ct_ref[...].astype(jnp.float32)        # (D, V)

    def gather(idx_row, table_t):
        # idx_row (1, TB) -> one-hot (V, TB) -> embeddings (D, TB) on the MXU.
        onehot = (idx_row == vocab_iota).astype(jnp.float32)
        return jnp.dot(table_t, onehot, preferred_element_type=jnp.float32)

    t_emb = gather(tgt_ref[...], t_table)            # (D, TB)
    c_emb = gather(ctx_ref[...], c_table)            # (D, TB)

    # Per-k scores keep vector-register pressure flat (no (K+1, D, TB) temp);
    # sublane-axis reductions land the result directly in the output layout.
    rows = [jnp.sum(t_emb * c_emb, axis=0, keepdims=True)]           # (1, TB)
    for k in range(k_neg):
        n_emb = gather(neg_ref[k:k + 1, :], c_table)                 # (D, TB)
        rows.append(jnp.sum(t_emb * n_emb, axis=0, keepdims=True))
    out_ref[...] = jnp.concatenate(rows, axis=0).astype(out_ref.dtype)


def _skipgram_pregathered_kernel(t_ref, c_ref, n_ref, out_ref):
    """Pre-gathered (large-vocab) path.

    t_ref  : (TB, D)     target embeddings
    c_ref  : (TB, D)     context embeddings
    n_ref  : (K, TB, D)  negative-sample embeddings
    out_ref: (K+1, TB)   row 0 = pos score, rows 1..K = neg scores
    """
    t = t_ref[...].astype(jnp.float32)
    c = c_ref[...].astype(jnp.float32)
    k_neg = n_ref.shape[0]

    rows = [jnp.sum(t * c, axis=-1).reshape(1, -1)]                  # (1, TB)
    for k in range(k_neg):                                           # per-k
        nk = n_ref[k].astype(jnp.float32)                            # (TB, D)
        rows.append(jnp.sum(t * nk, axis=-1).reshape(1, -1))
    out_ref[...] = jnp.concatenate(rows, axis=0).astype(out_ref.dtype)


# -----------------------------------------------------------------------------
# Wrappers
# -----------------------------------------------------------------------------

def _tile_and_pad(batch, tile_b, per_row_bytes, fixed_bytes):
    """Pick (tile_b, padded_batch).  tile_b is either a multiple of 128
    (multi-step grid, lane-dense blocks) or equal to the padded batch
    (single-step grid)."""
    b8 = _round_up(batch, 8)
    if tile_b is None:
        if b8 <= 128:
            return b8, b8
        avail = max(_VMEM_WORKSET_BUDGET - fixed_bytes, 128 * per_row_bytes)
        tile = int(avail // per_row_bytes)
        tile = max(128, min(tile, 2048))
        tile = (tile // 128) * 128
        # v7x megacore: keep >= 2 grid steps so the "parallel" axis can be
        # sharded across both TensorCores.
        tile = min(tile, _round_up((batch + 1) // 2, 128))
    else:
        tile = max(8, int(tile_b))
        tile = (tile // 128) * 128 if tile >= 128 else tile
    if tile < 128 or tile >= b8:
        return b8, b8
    return tile, _round_up(batch, tile)


def _pad_indices(target, context, negative_samples, b_pad):
    b = target.shape[0]
    if b_pad != b:
        pad = b_pad - b          # index 0 is always a valid row
        target = jnp.pad(target, (0, pad))
        context = jnp.pad(context, (0, pad))
        negative_samples = jnp.pad(negative_samples, ((0, pad), (0, 0)))
    return target, context, negative_samples


def _compiler_params():
    return pltpu.CompilerParams(dimension_semantics=("parallel",),
                                vmem_limit_bytes=_VMEM_LIMIT_BYTES)


def _forward_fused(target_table, context_table, target, context,
                   negative_samples, tile_b):
    b = target.shape[0]
    v, d = target_table.shape
    k = negative_samples.shape[1]
    k1 = k + 1
    isz = jnp.dtype(target_table.dtype).itemsize

    fixed = 2 * 2 * v * d * isz                         # two tables, 2 buffers
    per_row = 2 * ((k + 2) * 4 + k1 * 4) + v * 4 + 5 * d * 4
    tile_b, b_pad = _tile_and_pad(b, tile_b, per_row, fixed)
    target, context, negative_samples = _pad_indices(
        target, context, negative_samples, b_pad)

    tgt_idx = target.astype(jnp.int32).reshape(1, b_pad)
    ctx_idx = context.astype(jnp.int32).reshape(1, b_pad)
    neg_idx = negative_samples.astype(jnp.int32).T          # (K, Bp)
    tt_t = target_table.T                                   # (D, V) tiny copy
    ct_t = context_table.T                                   # (D, V)

    cost = pl.CostEstimate(
        flops=2 * b_pad * k1 * d + 2 * b_pad * (k + 2) * v * d,
        transcendentals=0,
        bytes_accessed=2 * v * d * isz + b_pad * (k + 2) * 4 + b_pad * k1 * 4)

    scores = pl.pallas_call(
        _skipgram_fused_kernel,
        out_shape=jax.ShapeDtypeStruct((k1, b_pad), jnp.float32),
        grid=(b_pad // tile_b,),
        in_specs=[
            pl.BlockSpec((1, tile_b), lambda i: (0, i)),
            pl.BlockSpec((1, tile_b), lambda i: (0, i)),
            pl.BlockSpec((k, tile_b), lambda i: (0, i)),
            pl.BlockSpec((d, v), lambda i: (0, 0)),   # grid-invariant: one DMA
            pl.BlockSpec((d, v), lambda i: (0, 0)),
        ],
        out_specs=pl.BlockSpec((k1, tile_b), lambda i: (0, i)),
        compiler_params=_compiler_params(),
        cost_estimate=cost,
    )(tgt_idx, ctx_idx, neg_idx, tt_t, ct_t)

    return scores[0, :b], scores[1:, :b].T


def _forward_pregathered(target_table, context_table, target, context,
                         negative_samples, tile_b):
    b = target.shape[0]
    d = target_table.shape[1]
    k = negative_samples.shape[1]
    k1 = k + 1
    isz = jnp.dtype(target_table.dtype).itemsize

    per_row = 2 * ((k + 2) * d * isz + k1 * 4) + 4 * d * 4
    tile_b, b_pad = _tile_and_pad(b, tile_b, per_row, 0)
    target, context, negative_samples = _pad_indices(
        target, context, negative_samples, b_pad)

    # nn.Embedding lookups stay as XLA gathers on this path; the negatives are
    # gathered straight into (K, Bp, D) so the kernel block's minor dims are
    # (tile_b, D) -- (8, 128)-aligned -- and no concatenate copy is needed.
    t_embed = jnp.take(target_table, target, axis=0)                 # (Bp, D)
    c_embed = jnp.take(context_table, context, axis=0)               # (Bp, D)
    n_embed = jnp.take(context_table, negative_samples.T, axis=0)    # (K, Bp, D)

    cost = pl.CostEstimate(
        flops=2 * b_pad * k1 * d,
        transcendentals=0,
        bytes_accessed=b_pad * (k + 2) * d * isz + b_pad * k1 * 4)

    scores = pl.pallas_call(
        _skipgram_pregathered_kernel,
        out_shape=jax.ShapeDtypeStruct((k1, b_pad), jnp.float32),
        grid=(b_pad // tile_b,),
        in_specs=[
            pl.BlockSpec((tile_b, d), lambda i: (i, 0)),
            pl.BlockSpec((tile_b, d), lambda i: (i, 0)),
            pl.BlockSpec((k, tile_b, d), lambda i: (0, i, 0)),
        ],
        out_specs=pl.BlockSpec((k1, tile_b), lambda i: (0, i)),
        compiler_params=_compiler_params(),
        cost_estimate=cost,
    )(t_embed, c_embed, n_embed)

    return scores[0, :b], scores[1:, :b].T


@functools.partial(jax.jit, static_argnames=("tile_b", "fuse_gathers"))
def skipgram_forward(target_table, context_table, target, context,
                     negative_samples, *, tile_b=None, fuse_gathers=None):
    """SkipGramNegativeSampling forward: returns (pos_score (B,), neg_score (B, K))."""
    v, d = target_table.shape
    isz = jnp.dtype(target_table.dtype).itemsize
    if fuse_gathers is None:
        # Fuse the embedding gathers into the kernel when both tables (double
        # buffered) fit comfortably in VMEM and the one-hot MXU gather is cheap.
        fuse_gathers = (4 * v * d * isz <= 8 * 1024 * 1024) and v <= 2048
    if fuse_gathers:
        return _forward_fused(target_table, context_table, target, context,
                              negative_samples, tile_b)
    # TODO(synk): for large vocabularies, replace the XLA row gathers with
    # in-kernel manual DMA gathers (scalar-prefetched indices + pl.ANY tables)
    # to also remove the (B, K, D) HBM round trip on the fallback path.
    return _forward_pregathered(target_table, context_table, target, context,
                                negative_samples, tile_b)


if __name__ == "__main__":
    # Small, deterministic synthetic setup.
    vocab_size = 64
    embedding_dim = 128
    B = 256   # -> tile_b=128, 2 grid steps (exercises pipelining / megacore)
    K = 8     # negative samples per example

    key = jax.random.PRNGKey(0)
    k_tgt, k_ctx, k_t, k_c, k_n = jax.random.split(key, 5)

    # Deterministic parameter init (nn.Embedding weights).
    target_table = jax.random.normal(k_tgt, (vocab_size, embedding_dim), jnp.float32)
    context_table = jax.random.normal(k_ctx, (vocab_size, embedding_dim), jnp.float32)

    # Example inputs (index tensors).
    target = jax.random.randint(k_t, (B,), 0, vocab_size)
    context = jax.random.randint(k_c, (B,), 0, vocab_size)
    negative_samples = jax.random.randint(k_n, (B, K), 0, vocab_size)

    # Plain-JAX reference (mirrors the torch module).
    t_e = jnp.take(target_table, target, axis=0)
    c_e = jnp.take(context_table, context, axis=0)
    n_e = jnp.take(context_table, negative_samples, axis=0)
    pos_ref = jnp.sum(t_e * c_e, axis=1)
    neg_ref = jnp.einsum("bd,bkd->bk", t_e, n_e)

    # Fused-gather path (tables VMEM-resident; the one used by this demo).
    pos_f, neg_f = skipgram_forward(target_table, context_table, target,
                                    context, negative_samples)
    # Pre-gathered fallback path (what very large vocabularies use).
    pos_g, neg_g = skipgram_forward(target_table, context_table, target,
                                    context, negative_samples,
                                    fuse_gathers=False)
    jax.block_until_ready((pos_f, neg_f, pos_g, neg_g))

    for pos, neg in ((pos_f, neg_f), (pos_g, neg_g)):
        assert pos.shape == (B,) and neg.shape == (B, K)
        np.testing.assert_allclose(np.asarray(pos), np.asarray(pos_ref),
                                   rtol=1e-5, atol=1e-5)
        np.testing.assert_allclose(np.asarray(neg), np.asarray(neg_ref),
                                   rtol=1e-5, atol=1e-5)

    print("KERNEL_OK")
</pallas_src>

<mosaic_0001>
module attributes {stable_mosaic.version = 11 : i64} {
  func.func @_skipgram_fused_kernel(%arg0: i32, %arg1: memref<1x128xi32, #tpu.memory_space<vmem>>, %arg2: memref<1x128xi32, #tpu.memory_space<vmem>>, %arg3: memref<8x128xi32, #tpu.memory_space<vmem>>, %arg4: memref<128x64xf32, #tpu.memory_space<vmem>>, %arg5: memref<128x64xf32, #tpu.memory_space<vmem>>, %arg6: memref<9x128xf32, #tpu.memory_space<vmem>>) attributes {dimension_semantics = [#tpu.dimension_semantics<parallel>], iteration_bounds = array<i64: 2>, scalar_prefetch = 0 : i64, scratch_operands = 0 : i64, tpu.core_type = #tpu.core_type<tc>, window_params = [{transform_indices = @transform_0, window_bounds = array<i64: 1, 128>}, {transform_indices = @transform_1, window_bounds = array<i64: 1, 128>}, {transform_indices = @transform_2, window_bounds = array<i64: 8, 128>}, {pipeline_mode = #tpu.pipeline_mode<synchronous>, transform_indices = @transform_3, window_bounds = array<i64: 128, 64>}, {pipeline_mode = #tpu.pipeline_mode<synchronous>, transform_indices = @transform_4, window_bounds = array<i64: 128, 64>}, {transform_indices = @transform_5, window_bounds = array<i64: 9, 128>}]} {
    %0 = tpu.iota {dimensions = array<i32: 0>} : vector<64x128xi32>
    %c0 = arith.constant 0 : index
    %c0_0 = arith.constant 0 : index
    %1 = vector.load %arg4[%c0, %c0_0] : memref<128x64xf32, #tpu.memory_space<vmem>>, vector<128x64xf32>
    %c0_1 = arith.constant 0 : index
    %c0_2 = arith.constant 0 : index
    %2 = vector.load %arg5[%c0_1, %c0_2] : memref<128x64xf32, #tpu.memory_space<vmem>>, vector<128x64xf32>
    %c0_3 = arith.constant 0 : index
    %c0_4 = arith.constant 0 : index
    %3 = vector.load %arg1[%c0_3, %c0_4] : memref<1x128xi32, #tpu.memory_space<vmem>>, vector<1x128xi32>
    %4 = vector.broadcast %3 : vector<1x128xi32> to vector<64x128xi32>
    %5 = arith.cmpi eq, %4, %0 : vector<64x128xi32>
    %6 = arith.extui %5 : vector<64x128xi1> to vector<64x128xi32>
    %7 = arith.sitofp %6 : vector<64x128xi32> to vector<64x128xf32>
    %cst = arith.constant dense<0.000000e+00> : vector<128x128xf32>
    %8 = tpu.matmul %1, %7, %cst {dimension_numbers = #tpu.dot_dimension_numbers<[1], [0], [0], [1], [0, 0, 1, 1], [], []>} : vector<128x64xf32>, vector<64x128xf32>, vector<128x128xf32> -> vector<128x128xf32>
    %c0_5 = arith.constant 0 : index
    %c0_6 = arith.constant 0 : index
    %9 = vector.load %arg2[%c0_5, %c0_6] : memref<1x128xi32, #tpu.memory_space<vmem>>, vector<1x128xi32>
    %10 = vector.broadcast %9 : vector<1x128xi32> to vector<64x128xi32>
    %11 = arith.cmpi eq, %10, %0 : vector<64x128xi32>
    %12 = arith.extui %11 : vector<64x128xi1> to vector<64x128xi32>
    %13 = arith.sitofp %12 : vector<64x128xi32> to vector<64x128xf32>
    %cst_7 = arith.constant dense<0.000000e+00> : vector<128x128xf32>
    %14 = tpu.matmul %2, %13, %cst_7 {dimension_numbers = #tpu.dot_dimension_numbers<[1], [0], [0], [1], [0, 0, 1, 1], [], []>} : vector<128x64xf32>, vector<64x128xf32>, vector<128x128xf32> -> vector<128x128xf32>
    %15 = arith.mulf %8, %14 : vector<128x128xf32>
    %cst_8 = arith.constant dense<0.000000e+00> : vector<128xf32>
    %16 = vector.multi_reduction <add>, %15, %cst_8 [0] : vector<128x128xf32> to vector<128xf32>
    %17 = vector.shape_cast %16 : vector<128xf32> to vector<1x128xf32>
    %c0_9 = arith.constant 0 : index
    %c0_10 = arith.constant 0 : index
    %18 = vector.load %arg3[%c0_9, %c0_10] : memref<8x128xi32, #tpu.memory_space<vmem>>, vector<1x128xi32>
    %19 = vector.broadcast %18 : vector<1x128xi32> to vector<64x128xi32>
    %20 = arith.cmpi eq, %19, %0 : vector<64x128xi32>
    %21 = arith.extui %20 : vector<64x128xi1> to vector<64x128xi32>
    %22 = arith.sitofp %21 : vector<64x128xi32> to vector<64x128xf32>
    %cst_11 = arith.constant dense<0.000000e+00> : vector<128x128xf32>
    %23 = tpu.matmul %2, %22, %cst_11 {dimension_numbers = #tpu.dot_dimension_numbers<[1], [0], [0], [1], [0, 0, 1, 1], [], []>} : vector<128x64xf32>, vector<64x128xf32>, vector<128x128xf32> -> vector<128x128xf32>
    %24 = arith.mulf %8, %23 : vector<128x128xf32>
    %cst_12 = arith.constant dense<0.000000e+00> : vector<128xf32>
    %25 = vector.multi_reduction <add>, %24, %cst_12 [0] : vector<128x128xf32> to vector<128xf32>
    %26 = vector.shape_cast %25 : vector<128xf32> to vector<1x128xf32>
    %c1 = arith.constant 1 : index
    %c0_13 = arith.constant 0 : index
    %27 = vector.load %arg3[%c1, %c0_13] : memref<8x128xi32, #tpu.memory_space<vmem>>, vector<1x128xi32>
    %28 = vector.broadcast %27 : vector<1x128xi32> to vector<64x128xi32>
    %29 = arith.cmpi eq, %28, %0 : vector<64x128xi32>
    %30 = arith.extui %29 : vector<64x128xi1> to vector<64x128xi32>
    %31 = arith.sitofp %30 : vector<64x128xi32> to vector<64x128xf32>
    %cst_14 = arith.constant dense<0.000000e+00> : vector<128x128xf32>
    %32 = tpu.matmul %2, %31, %cst_14 {dimension_numbers = #tpu.dot_dimension_numbers<[1], [0], [0], [1], [0, 0, 1, 1], [], []>} : vector<128x64xf32>, vector<64x128xf32>, vector<128x128xf32> -> vector<128x128xf32>
    %33 = arith.mulf %8, %32 : vector<128x128xf32>
    %cst_15 = arith.constant dense<0.000000e+00> : vector<128xf32>
    %34 = vector.multi_reduction <add>, %33, %cst_15 [0] : vector<128x128xf32> to vector<128xf32>
    %35 = vector.shape_cast %34 : vector<128xf32> to vector<1x128xf32>
    %c2 = arith.constant 2 : index
    %c0_16 = arith.constant 0 : index
    %36 = vector.load %arg3[%c2, %c0_16] : memref<8x128xi32, #tpu.memory_space<vmem>>, vector<1x128xi32>
    %37 = vector.broadcast %36 : vector<1x128xi32> to vector<64x128xi32>
    %38 = arith.cmpi eq, %37, %0 : vector<64x128xi32>
    %39 = arith.extui %38 : vector<64x128xi1> to vector<64x128xi32>
    %40 = arith.sitofp %39 : vector<64x128xi32> to vector<64x128xf32>
    %cst_17 = arith.constant dense<0.000000e+00> : vector<128x128xf32>
    %41 = tpu.matmul %2, %40, %cst_17 {dimension_numbers = #tpu.dot_dimension_numbers<[1], [0], [0], [1], [0, 0, 1, 1], [], []>} : vector<128x64xf32>, vector<64x128xf32>, vector<128x128xf32> -> vector<128x128xf32>
    %42 = arith.mulf %8, %41 : vector<128x128xf32>
    %cst_18 = arith.constant dense<0.000000e+00> : vector<128xf32>
    %43 = vector.multi_reduction <add>, %42, %cst_18 [0] : vector<128x128xf32> to vector<128xf32>
    %44 = vector.shape_cast %43 : vector<128xf32> to vector<1x128xf32>
    %c3 = arith.constant 3 : index
    %c0_19 = arith.constant 0 : index
    %45 = vector.load %arg3[%c3, %c0_19] : memref<8x128xi32, #tpu.memory_space<vmem>>, vector<1x128xi32>
    %46 = vector.broadcast %45 : vector<1x128xi32> to vector<64x128xi32>
    %47 = arith.cmpi eq, %46, %0 : vector<64x128xi32>
    %48 = arith.extui %47 : vector<64x128xi1> to vector<64x128xi32>
    %49 = arith.sitofp %48 : vector<64x128xi32> to vector<64x128xf32>
    %cst_20 = arith.constant dense<0.000000e+00> : vector<128x128xf32>
    %50 = tpu.matmul %2, %49, %cst_20 {dimension_numbers = #tpu.dot_dimension_numbers<[1], [0], [0], [1], [0, 0, 1, 1], [], []>} : vector<128x64xf32>, vector<64x128xf32>, vector<128x128xf32> -> vector<128x128xf32>
    %51 = arith.mulf %8, %50 : vector<128x128xf32>
    %cst_21 = arith.constant dense<0.000000e+00> : vector<128xf32>
    %52 = vector.multi_reduction <add>, %51, %cst_21 [0] : vector<128x128xf32> to vector<128xf32>
    %53 = vector.shape_cast %52 : vector<128xf32> to vector<1x128xf32>
    %c4 = arith.constant 4 : index
    %c0_22 = arith.constant 0 : index
    %54 = vector.load %arg3[%c4, %c0_22] : memref<8x128xi32, #tpu.memory_space<vmem>>, vector<1x128xi32>
    %55 = vector.broadcast %54 : vector<1x128xi32> to vector<64x128xi32>
    %56 = arith.cmpi eq, %55, %0 : vector<64x128xi32>
    %57 = arith.extui %56 : vector<64x128xi1> to vector<64x128xi32>
    %58 = arith.sitofp %57 : vector<64x128xi32> to vector<64x128xf32>
    %cst_23 = arith.constant dense<0.000000e+00> : vector<128x128xf32>
    %59 = tpu.matmul %2, %58, %cst_23 {dimension_numbers = #tpu.dot_dimension_numbers<[1], [0], [0], [1], [0, 0, 1, 1], [], []>} : vector<128x64xf32>, vector<64x128xf32>, vector<128x128xf32> -> vector<128x128xf32>
    %60 = arith.mulf %8, %59 : vector<128x128xf32>
    %cst_24 = arith.constant dense<0.000000e+00> : vector<128xf32>
    %61 = vector.multi_reduction <add>, %60, %cst_24 [0] : vector<128x128xf32> to vector<128xf32>
    %62 = vector.shape_cast %61 : vector<128xf32> to vector<1x128xf32>
    %c5 = arith.constant 5 : index
    %c0_25 = arith.constant 0 : index
    %63 = vector.load %arg3[%c5, %c0_25] : memref<8x128xi32, #tpu.memory_space<vmem>>, vector<1x128xi32>
    %64 = vector.broadcast %63 : vector<1x128xi32> to vector<64x128xi32>
    %65 = arith.cmpi eq, %64, %0 : vector<64x128xi32>
    %66 = arith.extui %65 : vector<64x128xi1> to vector<64x128xi32>
    %67 = arith.sitofp %66 : vector<64x128xi32> to vector<64x128xf32>
    %cst_26 = arith.constant dense<0.000000e+00> : vector<128x128xf32>
    %68 = tpu.matmul %2, %67, %cst_26 {dimension_numbers = #tpu.dot_dimension_numbers<[1], [0], [0], [1], [0, 0, 1, 1], [], []>} : vector<128x64xf32>, vector<64x128xf32>, vector<128x128xf32> -> vector<128x128xf32>
    %69 = arith.mulf %8, %68 : vector<128x128xf32>
    %cst_27 = arith.constant dense<0.000000e+00> : vector<128xf32>
    %70 = vector.multi_reduction <add>, %69, %cst_27 [0] : vector<128x128xf32> to vector<128xf32>
    %71 = vector.shape_cast %70 : vector<128xf32> to vector<1x128xf32>
    %c6 = arith.constant 6 : index
    %c0_28 = arith.constant 0 : index
    %72 = vector.load %arg3[%c6, %c0_28] : memref<8x128xi32, #tpu.memory_space<vmem>>, vector<1x128xi32>
    %73 = vector.broadcast %72 : vector<1x128xi32> to vector<64x128xi32>
    %74 = arith.cmpi eq, %73, %0 : vector<64x128xi32>
    %75 = arith.extui %74 : vector<64x128xi1> to vector<64x128xi32>
    %76 = arith.sitofp %75 : vector<64x128xi32> to vector<64x128xf32>
    %cst_29 = arith.constant dense<0.000000e+00> : vector<128x128xf32>
    %77 = tpu.matmul %2, %76, %cst_29 {dimension_numbers = #tpu.dot_dimension_numbers<[1], [0], [0], [1], [0, 0, 1, 1], [], []>} : vector<128x64xf32>, vector<64x128xf32>, vector<128x128xf32> -> vector<128x128xf32>
    %78 = arith.mulf %8, %77 : vector<128x128xf32>
    %cst_30 = arith.constant dense<0.000000e+00> : vector<128xf32>
    %79 = vector.multi_reduction <add>, %78, %cst_30 [0] : vector<128x128xf32> to vector<128xf32>
    %80 = vector.shape_cast %79 : vector<128xf32> to vector<1x128xf32>
    %c7 = arith.constant 7 : index
    %c0_31 = arith.constant 0 : index
    %81 = vector.load %arg3[%c7, %c0_31] : memref<8x128xi32, #tpu.memory_space<vmem>>, vector<1x128xi32>
    %82 = vector.broadcast %81 : vector<1x128xi32> to vector<64x128xi32>
    %83 = arith.cmpi eq, %82, %0 : vector<64x128xi32>
    %84 = arith.extui %83 : vector<64x128xi1> to vector<64x128xi32>
    %85 = arith.sitofp %84 : vector<64x128xi32> to vector<64x128xf32>
    %cst_32 = arith.constant dense<0.000000e+00> : vector<128x128xf32>
    %86 = tpu.matmul %2, %85, %cst_32 {dimension_numbers = #tpu.dot_dimension_numbers<[1], [0], [0], [1], [0, 0, 1, 1], [], []>} : vector<128x64xf32>, vector<64x128xf32>, vector<128x128xf32> -> vector<128x128xf32>
    %87 = arith.mulf %8, %86 : vector<128x128xf32>
    %cst_33 = arith.constant dense<0.000000e+00> : vector<128xf32>
    %88 = vector.multi_reduction <add>, %87, %cst_33 [0] : vector<128x128xf32> to vector<128xf32>
    %89 = vector.shape_cast %88 : vector<128xf32> to vector<1x128xf32>
    %90 = tpu.concatenate %17, %26, %35, %44, %53, %62, %71, %80, %89 in 0 : vector<1x128xf32>, vector<1x128xf32>, vector<1x128xf32>, vector<1x128xf32>, vector<1x128xf32>, vector<1x128xf32>, vector<1x128xf32>, vector<1x128xf32>, vector<1x128xf32> -> vector<9x128xf32>
    %c0_34 = arith.constant 0 : index
    %c0_35 = arith.constant 0 : index
    %91 = vector.load %arg6[%c0_34, %c0_35] : memref<9x128xf32, #tpu.memory_space<vmem>>, vector<9x128xf32>
    tpu.vector_store %arg6[%c0_34, %c0_35], %90 {strides = array<i32>} : memref<9x128xf32, #tpu.memory_space<vmem>>, vector<9x128xf32>,
    return
  }
  func.func @transform_0(%arg0: i32) -> (i32, i32) {
    %c0_i32 = arith.constant 0 : i32
    %c0_i32_0 = arith.constant 0 : i32
    return %c0_i32, %arg0 : i32, i32
  }
  func.func @transform_1(%arg0: i32) -> (i32, i32) {
    %c0_i32 = arith.constant 0 : i32
    %c0_i32_0 = arith.constant 0 : i32
    return %c0_i32, %arg0 : i32, i32
  }
  func.func @transform_2(%arg0: i32) -> (i32, i32) {
    %c0_i32 = arith.constant 0 : i32
    %c0_i32_0 = arith.constant 0 : i32
    return %c0_i32, %arg0 : i32, i32
  }
  func.func @transform_3(%arg0: i32) -> (i32, i32) {
    %c0_i32 = arith.constant 0 : i32
    %c0_i32_0 = arith.constant 0 : i32
    %c0_i32_1 = arith.constant 0 : i32
    return %c0_i32, %c0_i32_0 : i32, i32
  }
  func.func @transform_4(%arg0: i32) -> (i32, i32) {
    %c0_i32 = arith.constant 0 : i32
    %c0_i32_0 = arith.constant 0 : i32
    %c0_i32_1 = arith.constant 0 : i32
    return %c0_i32, %c0_i32_0 : i32, i32
  }
  func.func @transform_5(%arg0: i32) -> (i32, i32) {
    %c0_i32 = arith.constant 0 : i32
    %c0_i32_0 = arith.constant 0 : i32
    return %c0_i32, %arg0 : i32, i32
  }
}

</mosaic_0001>

<llo_original>
// kernel: skipgram_forward.1
$region0: #{skipgram_forward.1}
  #allocation0 [shape = 'u32[]', space=smem, size = 0x4, offset = 0x4, fixed_abs, tag = 'smem constant byte address 0x4 - core index']
  #allocation1 [shape = 'u32[144,128]{1,0:T(1,128)}', space=vmem, size = 0x12000, scoped, tag = 'internal scratch']
  %s0 = inlined_call_operand.vmem [shape: s32[1,256], index: 0, kind: input, shape index: {}]
  %s1 = inlined_call_operand.vmem [shape: s32[1,256], index: 1, kind: input, shape index: {}]
  %s2 = inlined_call_operand.vmem [shape: s32[8,256], index: 2, kind: input, shape index: {}]
  %s3 = inlined_call_operand.vmem [shape: f32[128,64], index: 3, kind: input, shape index: {}]
  %s4 = inlined_call_operand.vmem [shape: f32[128,64], index: 4, kind: input, shape index: {}]
  %s5 = inlined_call_operand.vmem [shape: f32[9,256], index: 5, kind: output, shape index: {}]
  %s6 = sld [smem:[#allocation0]]
  $region87: #{skipgram_forward.1} parent=0
    _
  %s8 = ssub.s32 1, %s6
  %s9 = scalar_select 0, %s8, %s6
  $region1: #{skipgram_forward.1} parent=0
    #allocation2 [shape = 'u8[16384]{0}', space=vmem, size = 0x4000, scoped, tag = 'output window, operand 0']
    loop: start=0, step=1, limit=4
    $region2: #{skipgram_forward.1} parent=1 // loop_pre_header
      _
    $region3: #{skipgram_forward.1} parent=1 // loop_header
      %s11 = sphi 0, %s15
      %p12 = scmp.ge.s32.totalorder %s11, 4
      %s21 = sphi 0, %s23
      %s24 = sphi 0, %s21
      %s25 = sphi 0, %s24
      %s41 = sphi 0, %s25
      %s47 = sphi 0, %s49
      %s50 = sphi 0, %s47
      %s51 = sphi 0, %s50
      %s67 = sphi 0, %s51
      %s73 = sphi 0, %s75
      %s76 = sphi 0, %s73
      %s77 = sphi 0, %s76
      %s93 = sphi 0, %s77
      %s97 = sphi 0, %s97
      %s99 = sphi 0, %s97
      %s100 = sphi 0, %s99
      %s114 = sphi 0, %s100
      %s118 = sphi 0, %s118
      %s120 = sphi 0, %s118
      %s121 = sphi 0, %s120
      %s135 = sphi 0, %s121
      %s141 = sphi 0, %s143
      %s144 = sphi 0, %s141
      %s145 = sphi 0, %s144
      %s161 = sphi 0, %s145
    $region4: #{skipgram_forward.1} parent=1 // loop_header_branch
      %14 = sbr.rel (%p12) target = $region8
    $region5: #{skipgram_forward.1} parent=1 // loop_body
      %s16 = ssub.s32 %s11, 1
      %s17 = ssub.s32 %s11, 2
      %s18 = sadd.s32 %s11, 1
      %s19 = ssub.s32 %s11, %s18
      %p20 = scmp.eq.s32.totalorder %s19, 0
      %s22 = sadd.s32 %s21, 1
      %s23 = scalar_select %p20, %s21, %s22
      %p26 = pneg %p20
      %p27 = scmp.eq.s32.totalorder %s11, 1
      %p28 = por %p26, %p27
      %p29 = scmp.ne.s32.totalorder %s21, %s24
      %p30 = scmp.eq.s32.totalorder %s11, 0
      %p31 = por %p29, %p30
      %p32 = scmp.ne.s32.totalorder %s21, %s24
      %p33 = scmp.eq.s32.totalorder %s16, 1
      %p34 = por %p32, %p33
      %p35 = scmp.ne.s32.totalorder %s24, %s25
      %p36 = scmp.eq.s32.totalorder %s16, 0
      %p37 = por %p35, %p36
      %p38 = scmp.ne.s32.totalorder %s24, %s25
      %p39 = scmp.eq.s32.totalorder %s17, 1
      %p40 = por %p38, %p39
      %p42 = scmp.ne.s32.totalorder %s25, %s41
      %p43 = scmp.eq.s32.totalorder %s17, 0
      %p44 = por %p42, %p43
      %s45 = ssub.s32 %s11, %s18
      %p46 = scmp.eq.s32.totalorder %s45, 0
      %s48 = sadd.s32 %s47, 1
      %s49 = scalar_select %p46, %s47, %s48
      %p52 = pneg %p46
      %p53 = scmp.eq.s32.totalorder %s11, 1
      %p54 = por %p52, %p53
      %p55 = scmp.ne.s32.totalorder %s47, %s50
      %p56 = scmp.eq.s32.totalorder %s11, 0
      %p57 = por %p55, %p56
      %p58 = scmp.ne.s32.totalorder %s47, %s50
      %p59 = scmp.eq.s32.totalorder %s16, 1
      %p60 = por %p58, %p59
      %p61 = scmp.ne.s32.totalorder %s50, %s51
      %p62 = scmp.eq.s32.totalorder %s16, 0
      %p63 = por %p61, %p62
      %p64 = scmp.ne.s32.totalorder %s50, %s51
      %p65 = scmp.eq.s32.totalorder %s17, 1
      %p66 = por %p64, %p65
      %p68 = scmp.ne.s32.totalorder %s51, %s67
      %p69 = scmp.eq.s32.totalorder %s17, 0
      %p70 = por %p68, %p69
      %s71 = ssub.s32 %s11, %s18
      %p72 = scmp.eq.s32.totalorder %s71, 0
      %s74 = sadd.s32 %s73, 1
      %s75 = scalar_select %p72, %s73, %s74
      %p78 = pneg %p72
      %p79 = scmp.eq.s32.totalorder %s11, 1
      %p80 = por %p78, %p79
      %p81 = scmp.ne.s32.totalorder %s73, %s76
      %p82 = scmp.eq.s32.totalorder %s11, 0
      %p83 = por %p81, %p82
      %p84 = scmp.ne.s32.totalorder %s73, %s76
      %p85 = scmp.eq.s32.totalorder %s16, 1
      %p86 = por %p84, %p85
      %p87 = scmp.ne.s32.totalorder %s76, %s77
      %p88 = scmp.eq.s32.totalorder %s16, 0
      %p89 = por %p87, %p88
      %p90 = scmp.ne.s32.totalorder %s76, %s77
      %p91 = scmp.eq.s32.totalorder %s17, 1
      %p92 = por %p90, %p91
      %p94 = scmp.ne.s32.totalorder %s77, %s93
      %p95 = scmp.eq.s32.totalorder %s17, 0
      %p96 = por %p94, %p95
      %s98 = sadd.s32 %s97, 1
      %p101 = scmp.eq.s32.totalorder %s11, 1
      %p102 = scmp.ne.s32.totalorder %s97, %s99
      %p103 = scmp.eq.s32.totalorder %s11, 0
      %p104 = por %p102, %p103
      %p105 = scmp.ne.s32.totalorder %s97, %s99
      %p106 = scmp.eq.s32.totalorder %s16, 1
      %p107 = por %p105, %p106
      %p108 = scmp.ne.s32.totalorder %s99, %s100
      %p109 = scmp.eq.s32.totalorder %s16, 0
      %p110 = por %p108, %p109
      %p111 = scmp.ne.s32.totalorder %s99, %s100
      %p112 = scmp.eq.s32.totalorder %s17, 1
      %p113 = por %p111, %p112
      %p115 = scmp.ne.s32.totalorder %s100, %s114
      %p116 = scmp.eq.s32.totalorder %s17, 0
      %p117 = por %p115, %p116
      %s119 = sadd.s32 %s118, 1
      %p122 = scmp.eq.s32.totalorder %s11, 1
      %p123 = scmp.ne.s32.totalorder %s118, %s120
      %p124 = scmp.eq.s32.totalorder %s11, 0
      %p125 = por %p123, %p124
      %p126 = scmp.ne.s32.totalorder %s118, %s120
      %p127 = scmp.eq.s32.totalorder %s16, 1
      %p128 = por %p126, %p127
      %p129 = scmp.ne.s32.totalorder %s120, %s121
      %p130 = scmp.eq.s32.totalorder %s16, 0
      %p131 = por %p129, %p130
      %p132 = scmp.ne.s32.totalorder %s120, %s121
      %p133 = scmp.eq.s32.totalorder %s17, 1
      %p134 = por %p132, %p133
      %p136 = scmp.ne.s32.totalorder %s121, %s135
      %p137 = scmp.eq.s32.totalorder %s17, 0
      %p138 = por %p136, %p137
      %s139 = ssub.s32 %s11, %s18
      %p140 = scmp.eq.s32.totalorder %s139, 0
      %s142 = sadd.s32 %s141, 1
      %s143 = scalar_select %p140, %s141, %s142
      %p146 = pneg %p140
      %p147 = scmp.eq.s32.totalorder %s11, 1
      %p148 = por %p146, %p147
      %p149 = scmp.ne.s32.totalorder %s141, %s144
      %p150 = scmp.eq.s32.totalorder %s11, 0
      %p151 = por %p149, %p150
      %p152 = scmp.ne.s32.totalorder %s141, %s144
      %p153 = scmp.eq.s32.totalorder %s16, 1
      %p154 = por %p152, %p153
      %p155 = scmp.ne.s32.totalorder %s144, %s145
      %p156 = scmp.eq.s32.totalorder %s16, 0
      %p157 = por %p155, %p156
      %p158 = scmp.ne.s32.totalorder %s144, %s145
      %p159 = scmp.eq.s32.totalorder %s17, 1
      %p160 = por %p158, %p159
      %p162 = scmp.ne.s32.totalorder %s145, %s161
      %p163 = scmp.eq.s32.totalorder %s17, 0
      %p164 = por %p162, %p163
      %p165 = scmp.le.s32.totalorder 1, %s11
      %p166 = scmp.lt.s32.totalorder %s11, 3
      %p167 = pnand %p165, %p166
      %p168 = pneg %p167
      // Predicated region
      $region9: #{skipgram_forward.1} parent=5 // pred_check
        _
      $region10: #{skipgram_forward.1} parent=5 // pred_check_branch
        %170 = sbr.rel (%p167) target = $region12
      $region11: #{skipgram_forward.1} parent=5 // pred_region
        %s171 = ssub.s32 %s11, 1
        // Predicated region
        $region13: #{skipgram_forward.1} parent=11 // pred_check
          %p172 = pneg %p110
        $region14: #{skipgram_forward.1} parent=11 // pred_check_branch
          %174 = sbr.rel (%p172) target = $region16
        $region15: #{skipgram_forward.1} parent=11 // pred_region
          _
        $region16: #{skipgram_forward.1} parent=11 // pred_fallthru
          _
        // Predicated region
        $region17: #{skipgram_forward.1} parent=11 // pred_check
          %p175 = pneg %p131
        $region18: #{skipgram_forward.1} parent=11 // pred_check_branch
          %177 = sbr.rel (%p175) target = $region20
        $region19: #{skipgram_forward.1} parent=11 // pred_region
          _
        $region20: #{skipgram_forward.1} parent=11 // pred_fallthru
          _
      $region12: #{skipgram_forward.1} parent=5 // pred_fallthru
        _
      %p178 = scmp.lt.s32.totalorder %s11, 2
      // Predicated region
      $region21: #{skipgram_forward.1} parent=5 // pred_check
        %p179 = pneg %p178
      $region22: #{skipgram_forward.1} parent=5 // pred_check_branch
        %181 = sbr.rel (%p179) target = $region24
      $region23: #{skipgram_forward.1} parent=5 // pred_region
        // Predicated region
        $region25: #{skipgram_forward.1} parent=23 // pred_check
          %p182 = pneg %p31
        $region26: #{skipgram_forward.1} parent=23 // pred_check_branch
          %184 = sbr.rel (%p182) target = $region28
        $region27: #{skipgram_forward.1} parent=23 // pred_region
          %p185 = scmp.lt.s32.totalorder %s11, 1
          %s186 = scalar_select %p185, %s11, 1
          %s187 = scalar_lea.vmem %s0, %s186
        $region28: #{skipgram_forward.1} parent=23 // pred_fallthru
          _
        // Predicated region
        $region29: #{skipgram_forward.1} parent=23 // pred_check
          %p188 = pneg %p57
        $region30: #{skipgram_forward.1} parent=23 // pred_check_branch
          %190 = sbr.rel (%p188) target = $region32
        $region31: #{skipgram_forward.1} parent=23 // pred_region
          %p191 = scmp.lt.s32.totalorder %s11, 1
          %s192 = scalar_select %p191, %s11, 1
          %s193 = scalar_lea.vmem %s1, %s192
        $region32: #{skipgram_forward.1} parent=23 // pred_fallthru
          _
        // Predicated region
        $region33: #{skipgram_forward.1} parent=23 // pred_check
          %p194 = pneg %p83
        $region34: #{skipgram_forward.1} parent=23 // pred_check_branch
          %196 = sbr.rel (%p194) target = $region36
        $region35: #{skipgram_forward.1} parent=23 // pred_region
          %p197 = scmp.lt.s32.totalorder %s11, 1
          %s198 = scalar_select %p197, %s11, 1
          %s199 = smul.addr %s198, 8
          %s200 = scalar_lea.vmem %s2, %s199
        $region36: #{skipgram_forward.1} parent=23 // pred_fallthru
          _
      $region24: #{skipgram_forward.1} parent=5 // pred_fallthru
        _
      %p201 = scmp.le.s32.totalorder 1, %s11
      %p202 = scmp.lt.s32.totalorder %s11, 3
      %p203 = pnand %p201, %p202
      %p204 = pneg %p203
      // Predicated region
      $region37: #{skipgram_forward.1} parent=5 // pred_check
        _
      $region38: #{skipgram_forward.1} parent=5 // pred_check_branch
        %206 = sbr.rel (%p203) target = $region40
      $region39: #{skipgram_forward.1} parent=5 // pred_region
        %s207 = ssub.s32 %s11, 1
        %p208 = scmp.lt.s32.totalorder %s16, 1
        %s209 = scalar_select %p208, %s16, 1
        %s210 = scalar_lea.vmem %s0, %s209
        %p211 = pneg %p37
        %p212 = pneg %p34
        %p213 = scmp.lt.s32.totalorder %s16, 1
        %s214 = scalar_select %p213, %s16, 1
        %s215 = scalar_lea.vmem %s1, %s214
        %p216 = pneg %p63
        %p217 = pneg %p60
        %p218 = scmp.lt.s32.totalorder %s16, 1
        %s219 = scalar_select %p218, %s16, 1
        %s220 = smul.addr %s219, 8
        %s221 = scalar_lea.vmem %s2, %s220
        %p222 = pneg %p89
        %p223 = pneg %p86
        %p224 = pneg %p110
        %p225 = pneg %p107
        %p226 = pneg %p131
        %p227 = pneg %p128
        %p228 = pneg %p157
        %p229 = pneg %p154
        %s230 = sand.u32 %s144, 1
        %s231 = sand.u32 %s144, 1
        %s232 = smul.addr %s231, 16
        %s233 = scalar_lea.vmem [#allocation2], %s232
        %p234 = scmp.lt.s32.totalorder %s16, 1
        %s235 = scalar_select %p234, %s16, 1
        %s236 = scalar_lea.vmem %s0, %s235
        %p237 = scmp.lt.s32.totalorder %s16, 1
        %s238 = scalar_select %p237, %s16, 1
        %s239 = scalar_lea.vmem %s1, %s238
        %p240 = scmp.lt.s32.totalorder %s16, 1
        %s241 = scalar_select %p240, %s16, 1
        %s242 = smul.addr %s241, 8
        %s243 = scalar_lea.vmem %s2, %s242
        %v244 = vlaneseq
        %v245 = vshrl.u32 %v244, 7
        %v246 = vadd.s32 %v245, 8
        %v247 = vadd.s32 %v245, 16
        %v248 = vadd.s32 %v245, 24
        %v249 = vadd.s32 %v245, 32
        %v250 = vadd.s32 %v245, 40
        %v251 = vadd.s32 %v245, 48
        %v252 = vadd.s32 %v245, 56
        %v253 = vld [vmem:[%s3] sm:$0xff]
        %v254 = vld [vmem:[%s3 + $0x8] sm:$0xff]
        %v255 = vld [vmem:[%s3 + $0x10] sm:$0xff]
        %v256 = vld [vmem:[%s3 + $0x18] sm:$0xff]
        %v257 = vld [vmem:[%s3 + $0x20] sm:$0xff]
        %v258 = vld [vmem:[%s3 + $0x28] sm:$0xff]
        %v259 = vld [vmem:[%s3 + $0x30] sm:$0xff]
        %v260 = vld [vmem:[%s3 + $0x38] sm:$0xff]
        %v261 = vld [vmem:[%s3 + $0x40] sm:$0xff]
        %v262 = vld [vmem:[%s3 + $0x48] sm:$0xff]
        %v263 = vld [vmem:[%s3 + $0x50] sm:$0xff]
        %v264 = vld [vmem:[%s3 + $0x58] sm:$0xff]
        %v265 = vld [vmem:[%s3 + $0x60] sm:$0xff]
        %v266 = vld [vmem:[%s3 + $0x68] sm:$0xff]
        %v267 = vld [vmem:[%s3 + $0x70] sm:$0xff]
        %v268 = vld [vmem:[%s3 + $0x78] sm:$0xff]
        %v269 = vld [vmem:[%s4] sm:$0xff]
        %v270 = vld [vmem:[%s4 + $0x8] sm:$0xff]
        %v271 = vld [vmem:[%s4 + $0x10] sm:$0xff]
        %v272 = vld [vmem:[%s4 + $0x18] sm:$0xff]
        %v273 = vld [vmem:[%s4 + $0x20] sm:$0xff]
        %v274 = vld [vmem:[%s4 + $0x28] sm:$0xff]
        %v275 = vld [vmem:[%s4 + $0x30] sm:$0xff]
        %v276 = vld [vmem:[%s4 + $0x38] sm:$0xff]
        %v277 = vld [vmem:[%s4 + $0x40] sm:$0xff]
        %v278 = vld [vmem:[%s4 + $0x48] sm:$0xff]
        %v279 = vld [vmem:[%s4 + $0x50] sm:$0xff]
        %v280 = vld [vmem:[%s4 + $0x58] sm:$0xff]
        %v281 = vld [vmem:[%s4 + $0x60] sm:$0xff]
        %v282 = vld [vmem:[%s4 + $0x68] sm:$0xff]
        %v283 = vld [vmem:[%s4 + $0x70] sm:$0xff]
        %v284 = vld [vmem:[%s4 + $0x78] sm:$0xff]
        %v285 = vld [vmem:[%s236] sm:$0x1]
        %v286 = vlaneseq
        %v287 = vshrl.u32 %v286, 7
        %v288 = vsub.s32 0, %v287
        %v289 = vrot.slane %v285, %v288
        %vm290 = vcmp.eq.s32.totalorder %v289, %v245
        %vm291 = vcmp.eq.s32.totalorder %v289, %v246
        %vm292 = vcmp.eq.s32.totalorder %v289, %v247
        %vm293 = vcmp.eq.s32.totalorder %v289, %v248
        %vm294 = vcmp.eq.s32.totalorder %v289, %v249
        %vm295 = vcmp.eq.s32.totalorder %v289, %v250
        %vm296 = vcmp.eq.s32.totalorder %v289, %v251
        %vm297 = vcmp.eq.s32.totalorder %v289, %v252
        %v298 = vsel %vm290, 1, 0
        %v299 = vsel %vm291, 1, 0
        %v300 = vsel %vm292, 1, 0
        %v301 = vsel %vm293, 1, 0
        %v302 = vsel %vm294, 1, 0
        %v303 = vsel %vm295, 1, 0
        %v304 = vsel %vm296, 1, 0
        %v305 = vsel %vm297, 1, 0
        %v306 = vcvt.s32.f32 %v298
        %v307 = vcvt.s32.f32 %v299
        %v308 = vcvt.s32.f32 %v300
        %v309 = vcvt.s32.f32 %v301
        %v310 = vcvt.s32.f32 %v302
        %v311 = vcvt.s32.f32 %v303
        %v312 = vcvt.s32.f32 %v304
        %v313 = vcvt.s32.f32 %v305
        %vm314 = vcmask 523264
        %v316 = vsel %vm314, %v253, 0
        %v319 = vsel %vm314, %v254, 0
        %v322 = vsel %vm314, %v255, 0
        %v325 = vsel %vm314, %v256, 0
        %v328 = vsel %vm314, %v257, 0
        %v331 = vsel %vm314, %v258, 0
        %v334 = vsel %vm314, %v259, 0
        %v337 = vsel %vm314, %v260, 0
        %v340 = vsel %vm314, %v261, 0
        %v343 = vsel %vm314, %v262, 0
        %v346 = vsel %vm314, %v263, 0
        %v349 = vsel %vm314, %v264, 0
        %v352 = vsel %vm314, %v265, 0
        %v355 = vsel %vm314, %v266, 0
        %v358 = vsel %vm314, %v267, 0
        %v361 = vsel %vm314, %v268, 0
        %363 = vmatprep.subr.mxu0 0.0
        %364 = vmatpush1.msra.mxu0 0.0
        %365 = vmatprep.subr.mxu0 0.0
        %366 = vmatpush1.msra.mxu0 0.0
        %367 = vmatprep.subr.mxu0 0.0
        %368 = vmatpush1.msra.mxu0 0.0
        %369 = vmatprep.subr.mxu0 0.0
        %370 = vmatpush1.msra.mxu0 0.0
        %371 = vmatprep.subr.mxu0 0.0
        %372 = vmatpush1.msra.mxu0 0.0
        %373 = vmatprep.subr.mxu0 0.0
        %374 = vmatpush1.msra.mxu0 0.0
        %375 = vmatprep.subr.mxu0 0.0
        %376 = vmatpush1.msra.mxu0 0.0
        %377 = vmatprep.subr.mxu0 0.0
        %378 = vmatpush1.msra.mxu0 0.0
        %379 = vmatprep.subr.mxu0 0.0
        %380 = vmatpush1.msra.mxu0 %v313
        %381 = vmatprep.subr.mxu0 0.0
        %382 = vmatpush1.msra.mxu0 %v312
        %383 = vmatprep.subr.mxu0 0.0
        %384 = vmatpush1.msra.mxu0 %v311
        %385 = vmatprep.subr.mxu0 0.0
        %386 = vmatpush1.msra.mxu0 %v310
        %387 = vmatprep.subr.mxu0 0.0
        %388 = vmatpush1.msra.mxu0 %v309
        %389 = vmatprep.subr.mxu0 0.0
        %390 = vmatpush1.msra.mxu0 %v308
        %391 = vmatprep.subr.mxu0 0.0
        %392 = vmatpush1.msra.mxu0 %v307
        %393 = vmatprep.subr.mxu0 0.0
        %394 = vmatpush1.msra.mxu0 %v306
        %395 = vmatprep.subr.mxu0 0.0
        %396 = vmatpush2.msra.mxu0 0.0
        %397 = vmatprep.subr.mxu0 0.0
        %398 = vmatpush2.msra.mxu0 0.0
        %399 = vmatprep.subr.mxu0 0.0
        %400 = vmatpush2.msra.mxu0 0.0
        %401 = vmatprep.subr.mxu0 0.0
        %402 = vmatpush2.msra.mxu0 0.0
        %403 = vmatprep.subr.mxu0 0.0
        %404 = vmatpush2.msra.mxu0 0.0
        %405 = vmatprep.subr.mxu0 0.0
        %406 = vmatpush2.msra.mxu0 0.0
        %407 = vmatprep.subr.mxu0 0.0
        %408 = vmatpush2.msra.mxu0 0.0
        %409 = vmatprep.subr.mxu0 0.0
        %410 = vmatpush2.msra.mxu0 0.0
        %411 = vmatprep.subr.mxu0 0.0
        %412 = vmatpush2.msra.mxu0 0.0
        %413 = vmatprep.subr.mxu0 0.0
        %414 = vmatpush2.msra.mxu0 0.0
        %415 = vmatprep.subr.mxu0 0.0
        %416 = vmatpush2.msra.mxu0 0.0
        %417 = vmatprep.subr.mxu0 0.0
        %418 = vmatpush2.msra.mxu0 0.0
        %419 = vmatprep.subr.mxu0 0.0
        %420 = vmatpush2.msra.mxu0 0.0
        %421 = vmatprep.subr.mxu0 0.0
        %422 = vmatpush2.msra.mxu0 0.0
        %423 = vmatprep.subr.mxu0 0.0
        %424 = vmatpush2.msra.mxu0 0.0
        %425 = vmatprep.subr.mxu0 0.0
        %426 = vmatpush2.msra.mxu0 0.0
        %427 = vmatprep.mubr.f32.mxu0 0.0
        %428 = vmatmul.mubr.f32.gmra.mxu0 %v316
        %v429 = vpop.f32.mrf.mxu0
        %v430 = vadd.f32 0.0, %v429
        %v431 = vpop.f32.mrf.mxu0
        %432 = vmatprep.mubr.f32.mxu0 0.0
        %433 = vmatmul.mubr.f32.gmra.mxu0 %v319
        %v434 = vpop.f32.mrf.mxu0
        %v435 = vadd.f32 0.0, %v434
        %v436 = vpop.f32.mrf.mxu0
        %437 = vmatprep.mubr.f32.mxu0 0.0
        %438 = vmatmul.mubr.f32.gmra.mxu0 %v322
        %v439 = vpop.f32.mrf.mxu0
        %v440 = vadd.f32 0.0, %v439
        %v441 = vpop.f32.mrf.mxu0
        %442 = vmatprep.mubr.f32.mxu0 0.0
        %443 = vmatmul.mubr.f32.gmra.mxu0 %v325
        %v444 = vpop.f32.mrf.mxu0
        %v445 = vadd.f32 0.0, %v444
        %v446 = vpop.f32.mrf.mxu0
        %447 = vmatprep.mubr.f32.mxu0 0.0
        %448 = vmatmul.mubr.f32.gmra.mxu0 %v328
        %v449 = vpop.f32.mrf.mxu0
        %v450 = vadd.f32 0.0, %v449
        %v451 = vpop.f32.mrf.mxu0
        %452 = vmatprep.mubr.f32.mxu0 0.0
        %453 = vmatmul.mubr.f32.gmra.mxu0 %v331
        %v454 = vpop.f32.mrf.mxu0
        %v455 = vadd.f32 0.0, %v454
        %v456 = vpop.f32.mrf.mxu0
        %457 = vmatprep.mubr.f32.mxu0 0.0
        %458 = vmatmul.mubr.f32.gmra.mxu0 %v334
        %v459 = vpop.f32.mrf.mxu0
        %v460 = vadd.f32 0.0, %v459
        %v461 = vpop.f32.mrf.mxu0
        %462 = vmatprep.mubr.f32.mxu0 0.0
        %463 = vmatmul.mubr.f32.gmra.mxu0 %v337
        %v464 = vpop.f32.mrf.mxu0
        %v465 = vadd.f32 0.0, %v464
        %v466 = vpop.f32.mrf.mxu0
        %467 = vmatprep.mubr.f32.mxu0 0.0
        %468 = vmatmul.mubr.f32.gmra.mxu0 %v340
        %v469 = vpop.f32.mrf.mxu0
        %v470 = vadd.f32 0.0, %v469
        %v471 = vpop.f32.mrf.mxu0
        %472 = vmatprep.mubr.f32.mxu0 0.0
        %473 = vmatmul.mubr.f32.gmra.mxu0 %v343
        %v474 = vpop.f32.mrf.mxu0
        %v475 = vadd.f32 0.0, %v474
        %v476 = vpop.f32.mrf.mxu0
        %477 = vmatprep.mubr.f32.mxu0 0.0
        %478 = vmatmul.mubr.f32.gmra.mxu0 %v346
        %v479 = vpop.f32.mrf.mxu0
        %v480 = vadd.f32 0.0, %v479
        %v481 = vpop.f32.mrf.mxu0
        %482 = vmatprep.mubr.f32.mxu0 0.0
        %483 = vmatmul.mubr.f32.gmra.mxu0 %v349
        %v484 = vpop.f32.mrf.mxu0
        %v485 = vadd.f32 0.0, %v484
        %v486 = vpop.f32.mrf.mxu0
        %487 = vmatprep.mubr.f32.mxu0 0.0
        %488 = vmatmul.mubr.f32.gmra.mxu0 %v352
        %v489 = vpop.f32.mrf.mxu0
        %v490 = vadd.f32 0.0, %v489
        %v491 = vpop.f32.mrf.mxu0
        %492 = vmatprep.mubr.f32.mxu0 0.0
        %493 = vmatmul.mubr.f32.gmra.mxu0 %v355
        %v494 = vpop.f32.mrf.mxu0
        %v495 = vadd.f32 0.0, %v494
        %v496 = vpop.f32.mrf.mxu0
        %497 = vmatprep.mubr.f32.mxu0 0.0
        %498 = vmatmul.mubr.f32.gmra.mxu0 %v358
        %v499 = vpop.f32.mrf.mxu0
        %v500 = vadd.f32 0.0, %v499
        %v501 = vpop.f32.mrf.mxu0
        %502 = vmatprep.mubr.f32.mxu0 0.0
        %503 = vmatmul.mubr.f32.gmra.mxu0 %v361
        %v504 = vpop.f32.mrf.mxu0
        %v505 = vadd.f32 0.0, %v504
        %v506 = vpop.f32.mrf.mxu0
        %507 = vdwg.mxu0
        %v508 = vld [vmem:[%s239] sm:$0x1]
        %v509 = vlaneseq
        %v510 = vshrl.u32 %v509, 7
        %v511 = vsub.s32 0, %v510
        %v512 = vrot.slane %v508, %v511
        %vm513 = vcmp.eq.s32.totalorder %v512, %v245
        %vm514 = vcmp.eq.s32.totalorder %v512, %v246
        %vm515 = vcmp.eq.s32.totalorder %v512, %v247
        %vm516 = vcmp.eq.s32.totalorder %v512, %v248
        %vm517 = vcmp.eq.s32.totalorder %v512, %v249
        %vm518 = vcmp.eq.s32.totalorder %v512, %v250
        %vm519 = vcmp.eq.s32.totalorder %v512, %v251
        %vm520 = vcmp.eq.s32.totalorder %v512, %v252
        %v521 = vsel %vm513, 1, 0
        %v522 = vsel %vm514, 1, 0
        %v523 = vsel %vm515, 1, 0
        %v524 = vsel %vm516, 1, 0
        %v525 = vsel %vm517, 1, 0
        %v526 = vsel %vm518, 1, 0
        %v527 = vsel %vm519, 1, 0
        %v528 = vsel %vm520, 1, 0
        %v529 = vcvt.s32.f32 %v521
        %v530 = vcvt.s32.f32 %v522
        %v531 = vcvt.s32.f32 %v523
        %v532 = vcvt.s32.f32 %v524
        %v533 = vcvt.s32.f32 %v525
        %v534 = vcvt.s32.f32 %v526
        %v535 = vcvt.s32.f32 %v527
        %v536 = vcvt.s32.f32 %v528
        %v538 = vsel %vm314, %v269, 0
        %v541 = vsel %vm314, %v270, 0
        %v544 = vsel %vm314, %v271, 0
        %v547 = vsel %vm314, %v272, 0
        %v550 = vsel %vm314, %v273, 0
        %v553 = vsel %vm314, %v274, 0
        %v556 = vsel %vm314, %v275, 0
        %v559 = vsel %vm314, %v276, 0
        %v562 = vsel %vm314, %v277, 0
        %v565 = vsel %vm314, %v278, 0
        %v568 = vsel %vm314, %v279, 0
        %v571 = vsel %vm314, %v280, 0
        %v574 = vsel %vm314, %v281, 0
        %v577 = vsel %vm314, %v282, 0
        %v580 = vsel %vm314, %v283, 0
        %v583 = vsel %vm314, %v284, 0
        %585 = vmatprep.subr.mxu0 0.0
        %586 = vmatpush1.msra.mxu0 0.0
        %587 = vmatprep.subr.mxu0 0.0
        %588 = vmatpush1.msra.mxu0 0.0
        %589 = vmatprep.subr.mxu0 0.0
        %590 = vmatpush1.msra.mxu0 0.0
        %591 = vmatprep.subr.mxu0 0.0
        %592 = vmatpush1.msra.mxu0 0.0
        %593 = vmatprep.subr.mxu0 0.0
        %594 = vmatpush1.msra.mxu0 0.0
        %595 = vmatprep.subr.mxu0 0.0
        %596 = vmatpush1.msra.mxu0 0.0
        %597 = vmatprep.subr.mxu0 0.0
        %598 = vmatpush1.msra.mxu0 0.0
        %599 = vmatprep.subr.mxu0 0.0
        %600 = vmatpush1.msra.mxu0 0.0
        %601 = vmatprep.subr.mxu0 0.0
        %602 = vmatpush1.msra.mxu0 %v536
        %603 = vmatprep.subr.mxu0 0.0
        %604 = vmatpush1.msra.mxu0 %v535
        %605 = vmatprep.subr.mxu0 0.0
        %606 = vmatpush1.msra.mxu0 %v534
        %607 = vmatprep.subr.mxu0 0.0
        %608 = vmatpush1.msra.mxu0 %v533
        %609 = vmatprep.subr.mxu0 0.0
        %610 = vmatpush1.msra.mxu0 %v532
        %611 = vmatprep.subr.mxu0 0.0
        %612 = vmatpush1.msra.mxu0 %v531
        %613 = vmatprep.subr.mxu0 0.0
        %614 = vmatpush1.msra.mxu0 %v530
        %615 = vmatprep.subr.mxu0 0.0
        %616 = vmatpush1.msra.mxu0 %v529
        %617 = vmatprep.subr.mxu0 0.0
        %618 = vmatpush2.msra.mxu0 0.0
        %619 = vmatprep.subr.mxu0 0.0
        %620 = vmatpush2.msra.mxu0 0.0
        %621 = vmatprep.subr.mxu0 0.0
        %622 = vmatpush2.msra.mxu0 0.0
        %623 = vmatprep.subr.mxu0 0.0
        %624 = vmatpush2.msra.mxu0 0.0
        %625 = vmatprep.subr.mxu0 0.0
        %626 = vmatpush2.msra.mxu0 0.0
        %627 = vmatprep.subr.mxu0 0.0
        %628 = vmatpush2.msra.mxu0 0.0
        %629 = vmatprep.subr.mxu0 0.0
        %630 = vmatpush2.msra.mxu0 0.0
        %631 = vmatprep.subr.mxu0 0.0
        %632 = vmatpush2.msra.mxu0 0.0
        %633 = vmatprep.subr.mxu0 0.0
        %634 = vmatpush2.msra.mxu0 0.0
        %635 = vmatprep.subr.mxu0 0.0
        %636 = vmatpush2.msra.mxu0 0.0
        %637 = vmatprep.subr.mxu0 0.0
        %638 = vmatpush2.msra.mxu0 0.0
        %639 = vmatprep.subr.mxu0 0.0
        %640 = vmatpush2.msra.mxu0 0.0
        %641 = vmatprep.subr.mxu0 0.0
        %642 = vmatpush2.msra.mxu0 0.0
        %643 = vmatprep.subr.mxu0 0.0
        %644 = vmatpush2.msra.mxu0 0.0
        %645 = vmatprep.subr.mxu0 0.0
        %646 = vmatpush2.msra.mxu0 0.0
        %647 = vmatprep.subr.mxu0 0.0
        %648 = vmatpush2.msra.mxu0 0.0
        %649 = vmatprep.mubr.f32.mxu0 0.0
        %650 = vmatmul.mubr.f32.gmra.mxu0 %v538
        %v651 = vpop.f32.mrf.mxu0
        %v652 = vadd.f32 0.0, %v651
        %v653 = vpop.f32.mrf.mxu0
        %654 = vmatprep.mubr.f32.mxu0 0.0
        %655 = vmatmul.mubr.f32.gmra.mxu0 %v541
        %v656 = vpop.f32.mrf.mxu0
        %v657 = vadd.f32 0.0, %v656
        %v658 = vpop.f32.mrf.mxu0
        %659 = vmatprep.mubr.f32.mxu0 0.0
        %660 = vmatmul.mubr.f32.gmra.mxu0 %v544
        %v661 = vpop.f32.mrf.mxu0
        %v662 = vadd.f32 0.0, %v661
        %v663 = vpop.f32.mrf.mxu0
        %664 = vmatprep.mubr.f32.mxu0 0.0
        %665 = vmatmul.mubr.f32.gmra.mxu0 %v547
        %v666 = vpop.f32.mrf.mxu0
        %v667 = vadd.f32 0.0, %v666
        %v668 = vpop.f32.mrf.mxu0
        %669 = vmatprep.mubr.f32.mxu0 0.0
        %670 = vmatmul.mubr.f32.gmra.mxu0 %v550
        %v671 = vpop.f32.mrf.mxu0
        %v672 = vadd.f32 0.0, %v671
        %v673 = vpop.f32.mrf.mxu0
        %674 = vmatprep.mubr.f32.mxu0 0.0
        %675 = vmatmul.mubr.f32.gmra.mxu0 %v553
        %v676 = vpop.f32.mrf.mxu0
        %v677 = vadd.f32 0.0, %v676
        %v678 = vpop.f32.mrf.mxu0
        %679 = vmatprep.mubr.f32.mxu0 0.0
        %680 = vmatmul.mubr.f32.gmra.mxu0 %v556
        %v681 = vpop.f32.mrf.mxu0
        %v682 = vadd.f32 0.0, %v681
        %v683 = vpop.f32.mrf.mxu0
        %684 = vmatprep.mubr.f32.mxu0 0.0
        %685 = vmatmul.mubr.f32.gmra.mxu0 %v559
        %v686 = vpop.f32.mrf.mxu0
        %v687 = vadd.f32 0.0, %v686
        %v688 = vpop.f32.mrf.mxu0
        %689 = vmatprep.mubr.f32.mxu0 0.0
        %690 = vmatmul.mubr.f32.gmra.mxu0 %v562
        %v691 = vpop.f32.mrf.mxu0
        %v692 = vadd.f32 0.0, %v691
        %v693 = vpop.f32.mrf.mxu0
        %694 = vmatprep.mubr.f32.mxu0 0.0
        %695 = vmatmul.mubr.f32.gmra.mxu0 %v565
        %v696 = vpop.f32.mrf.mxu0
        %v697 = vadd.f32 0.0, %v696
        %v698 = vpop.f32.mrf.mxu0
        %699 = vmatprep.mubr.f32.mxu0 0.0
        %700 = vmatmul.mubr.f32.gmra.mxu0 %v568
        %v701 = vpop.f32.mrf.mxu0
        %v702 = vadd.f32 0.0, %v701
        %v703 = vpop.f32.mrf.mxu0
        %704 = vmatprep.mubr.f32.mxu0 0.0
        %705 = vmatmul.mubr.f32.gmra.mxu0 %v571
        %v706 = vpop.f32.mrf.mxu0
        %v707 = vadd.f32 0.0, %v706
        %v708 = vpop.f32.mrf.mxu0
        %709 = vmatprep.mubr.f32.mxu0 0.0
        %710 = vmatmul.mubr.f32.gmra.mxu0 %v574
        %v711 = vpop.f32.mrf.mxu0
        %v712 = vadd.f32 0.0, %v711
        %v713 = vpop.f32.mrf.mxu0
        %714 = vmatprep.mubr.f32.mxu0 0.0
        %715 = vmatmul.mubr.f32.gmra.mxu0 %v577
        %v716 = vpop.f32.mrf.mxu0
        %v717 = vadd.f32 0.0, %v716
        %v718 = vpop.f32.mrf.mxu0
        %719 = vmatprep.mubr.f32.mxu0 0.0
        %720 = vmatmul.mubr.f32.gmra.mxu0 %v580
        %v721 = vpop.f32.mrf.mxu0
        %v722 = vadd.f32 0.0, %v721
        %v723 = vpop.f32.mrf.mxu0
        %724 = vmatprep.mubr.f32.mxu0 0.0
        %725 = vmatmul.mubr.f32.gmra.mxu0 %v583
        %v726 = vpop.f32.mrf.mxu0
        %v727 = vadd.f32 0.0, %v726
        %v728 = vpop.f32.mrf.mxu0
        %729 = vdwg.mxu0
        %v730 = vmul.f32 %v430, %v652
        %v731 = vmul.f32 %v435, %v657
        %v732 = vmul.f32 %v440, %v662
        %v733 = vmul.f32 %v445, %v667
        %v734 = vmul.f32 %v450, %v672
        %v735 = vmul.f32 %v455, %v677
        %v736 = vmul.f32 %v460, %v682
        %v737 = vmul.f32 %v465, %v687
        %v738 = vmul.f32 %v470, %v692
        %v739 = vmul.f32 %v475, %v697
        %v740 = vmul.f32 %v480, %v702
        %v741 = vmul.f32 %v485, %v707
        %v742 = vmul.f32 %v490, %v712
        %v743 = vmul.f32 %v495, %v717
        %v744 = vmul.f32 %v500, %v722
        %v745 = vmul.f32 %v505, %v727
        %v746 = vadd.f32 %v730, %v731
        %v747 = vadd.f32 %v746, %v732
        %v748 = vadd.f32 %v747, %v733
        %v749 = vadd.f32 %v748, %v734
        %v750 = vadd.f32 %v749, %v735
        %v751 = vadd.f32 %v750, %v736
        %v752 = vadd.f32 %v751, %v737
        %v753 = vadd.f32 %v752, %v738
        %v754 = vadd.f32 %v753, %v739
        %v755 = vadd.f32 %v754, %v740
        %v756 = vadd.f32 %v755, %v741
        %v757 = vadd.f32 %v756, %v742
        %v758 = vadd.f32 %v757, %v743
        %v759 = vadd.f32 %v758, %v744
        %v760 = vadd.f32 %v759, %v745
        %v761 = vrot.slane %v760, 4
        %v762 = vadd.f32 %v760, %v761
        %v763 = vrot.slane %v762, 2
        %v764 = vadd.f32 %v762, %v763
        %v765 = vrot.slane %v764, 1
        %v766 = vadd.f32 %v764, %v765
        %v767 = vld [vmem:[%s243] sm:$0x1]
        %v768 = vlaneseq
        %v769 = vshrl.u32 %v768, 7
        %v770 = vsub.s32 0, %v769
        %v771 = vrot.slane %v767, %v770
        %vm772 = vcmp.eq.s32.totalorder %v771, %v245
        %vm773 = vcmp.eq.s32.totalorder %v771, %v246
        %vm774 = vcmp.eq.s32.totalorder %v771, %v247
        %vm775 = vcmp.eq.s32.totalorder %v771, %v248
        %vm776 = vcmp.eq.s32.totalorder %v771, %v249
        %vm777 = vcmp.eq.s32.totalorder %v771, %v250
        %vm778 = vcmp.eq.s32.totalorder %v771, %v251
        %vm779 = vcmp.eq.s32.totalorder %v771, %v252
        %v780 = vsel %vm772, 1, 0
        %v781 = vsel %vm773, 1, 0
        %v782 = vsel %vm774, 1, 0
        %v783 = vsel %vm775, 1, 0
        %v784 = vsel %vm776, 1, 0
        %v785 = vsel %vm777, 1, 0
        %v786 = vsel %vm778, 1, 0
        %v787 = vsel %vm779, 1, 0
        %v788 = vcvt.s32.f32 %v780
        %v789 = vcvt.s32.f32 %v781
        %v790 = vcvt.s32.f32 %v782
        %v791 = vcvt.s32.f32 %v783
        %v792 = vcvt.s32.f32 %v784
        %v793 = vcvt.s32.f32 %v785
        %v794 = vcvt.s32.f32 %v786
        %v795 = vcvt.s32.f32 %v787
        %796 = vmatprep.subr.mxu0 0.0
        %797 = vmatpush1.msra.mxu0 0.0
        %798 = vmatprep.subr.mxu0 0.0
        %799 = vmatpush1.msra.mxu0 0.0
        %800 = vmatprep.subr.mxu0 0.0
        %801 = vmatpush1.msra.mxu0 0.0
        %802 = vmatprep.subr.mxu0 0.0
        %803 = vmatpush1.msra.mxu0 0.0
        %804 = vmatprep.subr.mxu0 0.0
        %805 = vmatpush1.msra.mxu0 0.0
        %806 = vmatprep.subr.mxu0 0.0
        %807 = vmatpush1.msra.mxu0 0.0
        %808 = vmatprep.subr.mxu0 0.0
        %809 = vmatpush1.msra.mxu0 0.0
        %810 = vmatprep.subr.mxu0 0.0
        %811 = vmatpush1.msra.mxu0 0.0
        %812 = vmatprep.subr.mxu0 0.0
        %813 = vmatpush1.msra.mxu0 %v795
        %814 = vmatprep.subr.mxu0 0.0
        %815 = vmatpush1.msra.mxu0 %v794
        %816 = vmatprep.subr.mxu0 0.0
        %817 = vmatpush1.msra.mxu0 %v793
        %818 = vmatprep.subr.mxu0 0.0
        %819 = vmatpush1.msra.mxu0 %v792
        %820 = vmatprep.subr.mxu0 0.0
        %821 = vmatpush1.msra.mxu0 %v791
        %822 = vmatprep.subr.mxu0 0.0
        %823 = vmatpush1.msra.mxu0 %v790
        %824 = vmatprep.subr.mxu0 0.0
        %825 = vmatpush1.msra.mxu0 %v789
        %826 = vmatprep.subr.mxu0 0.0
        %827 = vmatpush1.msra.mxu0 %v788
        %828 = vmatprep.subr.mxu0 0.0
        %829 = vmatpush2.msra.mxu0 0.0
        %830 = vmatprep.subr.mxu0 0.0
        %831 = vmatpush2.msra.mxu0 0.0
        %832 = vmatprep.subr.mxu0 0.0
        %833 = vmatpush2.msra.mxu0 0.0
        %834 = vmatprep.subr.mxu0 0.0
        %835 = vmatpush2.msra.mxu0 0.0
        %836 = vmatprep.subr.mxu0 0.0
        %837 = vmatpush2.msra.mxu0 0.0
        %838 = vmatprep.subr.mxu0 0.0
        %839 = vmatpush2.msra.mxu0 0.0
        %840 = vmatprep.subr.mxu0 0.0
        %841 = vmatpush2.msra.mxu0 0.0
        %842 = vmatprep.subr.mxu0 0.0
        %843 = vmatpush2.msra.mxu0 0.0
        %844 = vmatprep.subr.mxu0 0.0
        %845 = vmatpush2.msra.mxu0 0.0
        %846 = vmatprep.subr.mxu0 0.0
        %847 = vmatpush2.msra.mxu0 0.0
        %848 = vmatprep.subr.mxu0 0.0
        %849 = vmatpush2.msra.mxu0 0.0
        %850 = vmatprep.subr.mxu0 0.0
        %851 = vmatpush2.msra.mxu0 0.0
        %852 = vmatprep.subr.mxu0 0.0
        %853 = vmatpush2.msra.mxu0 0.0
        %854 = vmatprep.subr.mxu0 0.0
        %855 = vmatpush2.msra.mxu0 0.0
        %856 = vmatprep.subr.mxu0 0.0
        %857 = vmatpush2.msra.mxu0 0.0
        %858 = vmatprep.subr.mxu0 0.0
        %859 = vmatpush2.msra.mxu0 0.0
        %860 = vmatprep.mubr.f32.mxu0 0.0
        %861 = vmatmul.mubr.f32.gmra.mxu0 %v538
        %v862 = vpop.f32.mrf.mxu0
        %v863 = vadd.f32 0.0, %v862
        %v864 = vpop.f32.mrf.mxu0
        %865 = vmatprep.mubr.f32.mxu0 0.0
        %866 = vmatmul.mubr.f32.gmra.mxu0 %v541
        %v867 = vpop.f32.mrf.mxu0
        %v868 = vadd.f32 0.0, %v867
        %v869 = vpop.f32.mrf.mxu0
        %870 = vmatprep.mubr.f32.mxu0 0.0
        %871 = vmatmul.mubr.f32.gmra.mxu0 %v544
        %v872 = vpop.f32.mrf.mxu0
        %v873 = vadd.f32 0.0, %v872
        %v874 = vpop.f32.mrf.mxu0
        %875 = vmatprep.mubr.f32.mxu0 0.0
        %876 = vmatmul.mubr.f32.gmra.mxu0 %v547
        %v877 = vpop.f32.mrf.mxu0
        %v878 = vadd.f32 0.0, %v877
        %v879 = vpop.f32.mrf.mxu0
        %880 = vmatprep.mubr.f32.mxu0 0.0
        %881 = vmatmul.mubr.f32.gmra.mxu0 %v550
        %v882 = vpop.f32.mrf.mxu0
        %v883 = vadd.f32 0.0, %v882
        %v884 = vpop.f32.mrf.mxu0
        %885 = vmatprep.mubr.f32.mxu0 0.0
        %886 = vmatmul.mubr.f32.gmra.mxu0 %v553
        %v887 = vpop.f32.mrf.mxu0
        %v888 = vadd.f32 0.0, %v887
        %v889 = vpop.f32.mrf.mxu0
        %890 = vmatprep.mubr.f32.mxu0 0.0
        %891 = vmatmul.mubr.f32.gmra.mxu0 %v556
        %v892 = vpop.f32.mrf.mxu0
        %v893 = vadd.f32 0.0, %v892
        %v894 = vpop.f32.mrf.mxu0
        %895 = vmatprep.mubr.f32.mxu0 0.0
        %896 = vmatmul.mubr.f32.gmra.mxu0 %v559
        %v897 = vpop.f32.mrf.mxu0
        %v898 = vadd.f32 0.0, %v897
        %v899 = vpop.f32.mrf.mxu0
        %900 = vmatprep.mubr.f32.mxu0 0.0
        %901 = vmatmul.mubr.f32.gmra.mxu0 %v562
        %v902 = vpop.f32.mrf.mxu0
        %v903 = vadd.f32 0.0, %v902
        %v904 = vpop.f32.mrf.mxu0
        %905 = vmatprep.mubr.f32.mxu0 0.0
        %906 = vmatmul.mubr.f32.gmra.mxu0 %v565
        %v907 = vpop.f32.mrf.mxu0
        %v908 = vadd.f32 0.0, %v907
        %v909 = vpop.f32.mrf.mxu0
        %910 = vmatprep.mubr.f32.mxu0 0.0
        %911 = vmatmul.mubr.f32.gmra.mxu0 %v568
        %v912 = vpop.f32.mrf.mxu0
        %v913 = vadd.f32 0.0, %v912
        %v914 = vpop.f32.mrf.mxu0
        %915 = vmatprep.mubr.f32.mxu0 0.0
        %916 = vmatmul.mubr.f32.gmra.mxu0 %v571
        %v917 = vpop.f32.mrf.mxu0
        %v918 = vadd.f32 0.0, %v917
        %v919 = vpop.f32.mrf.mxu0
        %920 = vmatprep.mubr.f32.mxu0 0.0
        %921 = vmatmul.mubr.f32.gmra.mxu0 %v574
        %v922 = vpop.f32.mrf.mxu0
        %v923 = vadd.f32 0.0, %v922
        %v924 = vpop.f32.mrf.mxu0
        %925 = vmatprep.mubr.f32.mxu0 0.0
        %926 = vmatmul.mubr.f32.gmra.mxu0 %v577
        %v927 = vpop.f32.mrf.mxu0
        %v928 = vadd.f32 0.0, %v927
        %v929 = vpop.f32.mrf.mxu0
        %930 = vmatprep.mubr.f32.mxu0 0.0
        %931 = vmatmul.mubr.f32.gmra.mxu0 %v580
        %v932 = vpop.f32.mrf.mxu0
        %v933 = vadd.f32 0.0, %v932
        %v934 = vpop.f32.mrf.mxu0
        %935 = vmatprep.mubr.f32.mxu0 0.0
        %936 = vmatmul.mubr.f32.gmra.mxu0 %v583
        %v937 = vpop.f32.mrf.mxu0
        %v938 = vadd.f32 0.0, %v937
        %v939 = vpop.f32.mrf.mxu0
        %940 = vdwg.mxu0
        %v941 = vmul.f32 %v430, %v863
        %v942 = vmul.f32 %v435, %v868
        %v943 = vmul.f32 %v440, %v873
        %v944 = vmul.f32 %v445, %v878
        %v945 = vmul.f32 %v450, %v883
        %v946 = vmul.f32 %v455, %v888
        %v947 = vmul.f32 %v460, %v893
        %v948 = vmul.f32 %v465, %v898
        %v949 = vmul.f32 %v470, %v903
        %v950 = vmul.f32 %v475, %v908
        %v951 = vmul.f32 %v480, %v913
        %v952 = vmul.f32 %v485, %v918
        %v953 = vmul.f32 %v490, %v923
        %v954 = vmul.f32 %v495, %v928
        %v955 = vmul.f32 %v500, %v933
        %v956 = vmul.f32 %v505, %v938
        %v957 = vadd.f32 %v941, %v942
        %v958 = vadd.f32 %v957, %v943
        %v959 = vadd.f32 %v958, %v944
        %v960 = vadd.f32 %v959, %v945
        %v961 = vadd.f32 %v960, %v946
        %v962 = vadd.f32 %v961, %v947
        %v963 = vadd.f32 %v962, %v948
        %v964 = vadd.f32 %v963, %v949
        %v965 = vadd.f32 %v964, %v950
        %v966 = vadd.f32 %v965, %v951
        %v967 = vadd.f32 %v966, %v952
        %v968 = vadd.f32 %v967, %v953
        %v969 = vadd.f32 %v968, %v954
        %v970 = vadd.f32 %v969, %v955
        %v971 = vadd.f32 %v970, %v956
        %v972 = vrot.slane %v971, 4
        %v973 = vadd.f32 %v971, %v972
        %v974 = vrot.slane %v973, 2
        %v975 = vadd.f32 %v973, %v974
        %v976 = vrot.slane %v975, 1
        %v977 = vadd.f32 %v975, %v976
        %v978 = vld [vmem:[%s243 + $0x1] sm:$0x1]
        %v979 = vlaneseq
        %v980 = vshrl.u32 %v979, 7
        %v981 = vsub.s32 0, %v980
        %v982 = vrot.slane %v978, %v981
        %vm983 = vcmp.eq.s32.totalorder %v982, %v245
        %vm984 = vcmp.eq.s32.totalorder %v982, %v246
        %vm985 = vcmp.eq.s32.totalorder %v982, %v247
        %vm986 = vcmp.eq.s32.totalorder %v982, %v248
        %vm987 = vcmp.eq.s32.totalorder %v982, %v249
        %vm988 = vcmp.eq.s32.totalorder %v982, %v250
        %vm989 = vcmp.eq.s32.totalorder %v982, %v251
        %vm990 = vcmp.eq.s32.totalorder %v982, %v252
        %v991 = vsel %vm983, 1, 0
        %v992 = vsel %vm984, 1, 0
        %v993 = vsel %vm985, 1, 0
        %v994 = vsel %vm986, 1, 0
        %v995 = vsel %vm987, 1, 0
        %v996 = vsel %vm988, 1, 0
        %v997 = vsel %vm989, 1, 0
        %v998 = vsel %vm990, 1, 0
        %v999 = vcvt.s32.f32 %v991
        %v1000 = vcvt.s32.f32 %v992
        %v1001 = vcvt.s32.f32 %v993
        %v1002 = vcvt.s32.f32 %v994
        %v1003 = vcvt.s32.f32 %v995
        %v1004 = vcvt.s32.f32 %v996
        %v1005 = vcvt.s32.f32 %v997
        %v1006 = vcvt.s32.f32 %v998
        %1007 = vmatprep.subr.mxu0 0.0
        %1008 = vmatpush1.msra.mxu0 0.0
        %1009 = vmatprep.subr.mxu0 0.0
        %1010 = vmatpush1.msra.mxu0 0.0
        %1011 = vmatprep.subr.mxu0 0.0
        %1012 = vmatpush1.msra.mxu0 0.0
        %1013 = vmatprep.subr.mxu0 0.0
        %1014 = vmatpush1.msra.mxu0 0.0
        %1015 = vmatprep.subr.mxu0 0.0
        %1016 = vmatpush1.msra.mxu0 0.0
        %1017 = vmatprep.subr.mxu0 0.0
        %1018 = vmatpush1.msra.mxu0 0.0
        %1019 = vmatprep.subr.mxu0 0.0
        %1020 = vmatpush1.msra.mxu0 0.0
        %1021 = vmatprep.subr.mxu0 0.0
        %1022 = vmatpush1.msra.mxu0 0.0
        %1023 = vmatprep.subr.mxu0 0.0
        %1024 = vmatpush1.msra.mxu0 %v1006
        %1025 = vmatprep.subr.mxu0 0.0
        %1026 = vmatpush1.msra.mxu0 %v1005
        %1027 = vmatprep.subr.mxu0 0.0
        %1028 = vmatpush1.msra.mxu0 %v1004
        %1029 = vmatprep.subr.mxu0 0.0
        %1030 = vmatpush1.msra.mxu0 %v1003
        %1031 = vmatprep.subr.mxu0 0.0
        %1032 = vmatpush1.msra.mxu0 %v1002
        %1033 = vmatprep.subr.mxu0 0.0
        %1034 = vmatpush1.msra.mxu0 %v1001
        %1035 = vmatprep.subr.mxu0 0.0
        %1036 = vmatpush1.msra.mxu0 %v1000
        %1037 = vmatprep.subr.mxu0 0.0
        %1038 = vmatpush1.msra.mxu0 %v999
        %1039 = vmatprep.subr.mxu0 0.0
        %1040 = vmatpush2.msra.mxu0 0.0
        %1041 = vmatprep.subr.mxu0 0.0
        %1042 = vmatpush2.msra.mxu0 0.0
        %1043 = vmatprep.subr.mxu0 0.0
        %1044 = vmatpush2.msra.mxu0 0.0
        %1045 = vmatprep.subr.mxu0 0.0
        %1046 = vmatpush2.msra.mxu0 0.0
        %1047 = vmatprep.subr.mxu0 0.0
        %1048 = vmatpush2.msra.mxu0 0.0
        %1049 = vmatprep.subr.mxu0 0.0
        %1050 = vmatpush2.msra.mxu0 0.0
        %1051 = vmatprep.subr.mxu0 0.0
        %1052 = vmatpush2.msra.mxu0 0.0
        %1053 = vmatprep.subr.mxu0 0.0
        %1054 = vmatpush2.msra.mxu0 0.0
        %1055 = vmatprep.subr.mxu0 0.0
        %1056 = vmatpush2.msra.mxu0 0.0
        %1057 = vmatprep.subr.mxu0 0.0
        %1058 = vmatpush2.msra.mxu0 0.0
        %1059 = vmatprep.subr.mxu0 0.0
        %1060 = vmatpush2.msra.mxu0 0.0
        %1061 = vmatprep.subr.mxu0 0.0
        %1062 = vmatpush2.msra.mxu0 0.0
        %1063 = vmatprep.subr.mxu0 0.0
        %1064 = vmatpush2.msra.mxu0 0.0
        %1065 = vmatprep.subr.mxu0 0.0
        %1066 = vmatpush2.msra.mxu0 0.0
        %1067 = vmatprep.subr.mxu0 0.0
        %1068 = vmatpush2.msra.mxu0 0.0
        %1069 = vmatprep.subr.mxu0 0.0
        %1070 = vmatpush2.msra.mxu0 0.0
        %1071 = vmatprep.mubr.f32.mxu0 0.0
        %1072 = vmatmul.mubr.f32.gmra.mxu0 %v538
        %v1073 = vpop.f32.mrf.mxu0
        %v1074 = vadd.f32 0.0, %v1073
        %v1075 = vpop.f32.mrf.mxu0
        %1076 = vmatprep.mubr.f32.mxu0 0.0
        %1077 = vmatmul.mubr.f32.gmra.mxu0 %v541
        %v1078 = vpop.f32.mrf.mxu0
        %v1079 = vadd.f32 0.0, %v1078
        %v1080 = vpop.f32.mrf.mxu0
        %1081 = vmatprep.mubr.f32.mxu0 0.0
        %1082 = vmatmul.mubr.f32.gmra.mxu0 %v544
        %v1083 = vpop.f32.mrf.mxu0
        %v1084 = vadd.f32 0.0, %v1083
        %v1085 = vpop.f32.mrf.mxu0
        %1086 = vmatprep.mubr.f32.mxu0 0.0
        %1087 = vmatmul.mubr.f32.gmra.mxu0 %v547
        %v1088 = vpop.f32.mrf.mxu0
        %v1089 = vadd.f32 0.0, %v1088
        %v1090 = vpop.f32.mrf.mxu0
        %1091 = vmatprep.mubr.f32.mxu0 0.0
        %1092 = vmatmul.mubr.f32.gmra.mxu0 %v550
        %v1093 = vpop.f32.mrf.mxu0
        %v1094 = vadd.f32 0.0, %v1093
        %v1095 = vpop.f32.mrf.mxu0
        %1096 = vmatprep.mubr.f32.mxu0 0.0
        %1097 = vmatmul.mubr.f32.gmra.mxu0 %v553
        %v1098 = vpop.f32.mrf.mxu0
        %v1099 = vadd.f32 0.0, %v1098
        %v1100 = vpop.f32.mrf.mxu0
        %1101 = vmatprep.mubr.f32.mxu0 0.0
        %1102 = vmatmul.mubr.f32.gmra.mxu0 %v556
        %v1103 = vpop.f32.mrf.mxu0
        %v1104 = vadd.f32 0.0, %v1103
        %v1105 = vpop.f32.mrf.mxu0
        %1106 = vmatprep.mubr.f32.mxu0 0.0
        %1107 = vmatmul.mubr.f32.gmra.mxu0 %v559
        %v1108 = vpop.f32.mrf.mxu0
        %v1109 = vadd.f32 0.0, %v1108
        %v1110 = vpop.f32.mrf.mxu0
        %1111 = vmatprep.mubr.f32.mxu0 0.0
        %1112 = vmatmul.mubr.f32.gmra.mxu0 %v562
        %v1113 = vpop.f32.mrf.mxu0
        %v1114 = vadd.f32 0.0, %v1113
        %v1115 = vpop.f32.mrf.mxu0
        %1116 = vmatprep.mubr.f32.mxu0 0.0
        %1117 = vmatmul.mubr.f32.gmra.mxu0 %v565
        %v1118 = vpop.f32.mrf.mxu0
        %v1119 = vadd.f32 0.0, %v1118
        %v1120 = vpop.f32.mrf.mxu0
        %1121 = vmatprep.mubr.f32.mxu0 0.0
        %1122 = vmatmul.mubr.f32.gmra.mxu0 %v568
        %v1123 = vpop.f32.mrf.mxu0
        %v1124 = vadd.f32 0.0, %v1123
        %v1125 = vpop.f32.mrf.mxu0
        %1126 = vmatprep.mubr.f32.mxu0 0.0
        %1127 = vmatmul.mubr.f32.gmra.mxu0 %v571
        %v1128 = vpop.f32.mrf.mxu0
        %v1129 = vadd.f32 0.0, %v1128
        %v1130 = vpop.f32.mrf.mxu0
        %1131 = vmatprep.mubr.f32.mxu0 0.0
        %1132 = vmatmul.mubr.f32.gmra.mxu0 %v574
        %v1133 = vpop.f32.mrf.mxu0
        %v1134 = vadd.f32 0.0, %v1133
        %v1135 = vpop.f32.mrf.mxu0
        %1136 = vmatprep.mubr.f32.mxu0 0.0
        %1137 = vmatmul.mubr.f32.gmra.mxu0 %v577
        %v1138 = vpop.f32.mrf.mxu0
        %v1139 = vadd.f32 0.0, %v1138
        %v1140 = vpop.f32.mrf.mxu0
        %1141 = vmatprep.mubr.f32.mxu0 0.0
        %1142 = vmatmul.mubr.f32.gmra.mxu0 %v580
        %v1143 = vpop.f32.mrf.mxu0
        %v1144 = vadd.f32 0.0, %v1143
        %v1145 = vpop.f32.mrf.mxu0
        %1146 = vmatprep.mubr.f32.mxu0 0.0
        %1147 = vmatmul.mubr.f32.gmra.mxu0 %v583
        %v1148 = vpop.f32.mrf.mxu0
        %v1149 = vadd.f32 0.0, %v1148
        %v1150 = vpop.f32.mrf.mxu0
        %1151 = vdwg.mxu0
        %v1152 = vmul.f32 %v430, %v1074
        %v1153 = vmul.f32 %v435, %v1079
        %v1154 = vmul.f32 %v440, %v1084
        %v1155 = vmul.f32 %v445, %v1089
        %v1156 = vmul.f32 %v450, %v1094
        %v1157 = vmul.f32 %v455, %v1099
        %v1158 = vmul.f32 %v460, %v1104
        %v1159 = vmul.f32 %v465, %v1109
        %v1160 = vmul.f32 %v470, %v1114
        %v1161 = vmul.f32 %v475, %v1119
        %v1162 = vmul.f32 %v480, %v1124
        %v1163 = vmul.f32 %v485, %v1129
        %v1164 = vmul.f32 %v490, %v1134
        %v1165 = vmul.f32 %v495, %v1139
        %v1166 = vmul.f32 %v500, %v1144
        %v1167 = vmul.f32 %v505, %v1149
        %v1168 = vadd.f32 %v1152, %v1153
        %v1169 = vadd.f32 %v1168, %v1154
        %v1170 = vadd.f32 %v1169, %v1155
        %v1171 = vadd.f32 %v1170, %v1156
        %v1172 = vadd.f32 %v1171, %v1157
        %v1173 = vadd.f32 %v1172, %v1158
        %v1174 = vadd.f32 %v1173, %v1159
        %v1175 = vadd.f32 %v1174, %v1160
        %v1176 = vadd.f32 %v1175, %v1161
        %v1177 = vadd.f32 %v1176, %v1162
        %v1178 = vadd.f32 %v1177, %v1163
        %v1179 = vadd.f32 %v1178, %v1164
        %v1180 = vadd.f32 %v1179, %v1165
        %v1181 = vadd.f32 %v1180, %v1166
        %v1182 = vadd.f32 %v1181, %v1167
        %v1183 = vrot.slane %v1182, 4
        %v1184 = vadd.f32 %v1182, %v1183
        %v1185 = vrot.slane %v1184, 2
        %v1186 = vadd.f32 %v1184, %v1185
        %v1187 = vrot.slane %v1186, 1
        %v1188 = vadd.f32 %v1186, %v1187
        %v1189 = vld [vmem:[%s243 + $0x2] sm:$0x1]
        %v1190 = vlaneseq
        %v1191 = vshrl.u32 %v1190, 7
        %v1192 = vsub.s32 0, %v1191
        %v1193 = vrot.slane %v1189, %v1192
        %vm1194 = vcmp.eq.s32.totalorder %v1193, %v245
        %vm1195 = vcmp.eq.s32.totalorder %v1193, %v246
        %vm1196 = vcmp.eq.s32.totalorder %v1193, %v247
        %vm1197 = vcmp.eq.s32.totalorder %v1193, %v248
        %vm1198 = vcmp.eq.s32.totalorder %v1193, %v249
        %vm1199 = vcmp.eq.s32.totalorder %v1193, %v250
        %vm1200 = vcmp.eq.s32.totalorder %v1193, %v251
        %vm1201 = vcmp.eq.s32.totalorder %v1193, %v252
        %v1202 = vsel %vm1194, 1, 0
        %v1203 = vsel %vm1195, 1, 0
        %v1204 = vsel %vm1196, 1, 0
        %v1205 = vsel %vm1197, 1, 0
        %v1206 = vsel %vm1198, 1, 0
        %v1207 = vsel %vm1199, 1, 0
        %v1208 = vsel %vm1200, 1, 0
        %v1209 = vsel %vm1201, 1, 0
        %v1210 = vcvt.s32.f32 %v1202
        %v1211 = vcvt.s32.f32 %v1203
        %v1212 = vcvt.s32.f32 %v1204
        %v1213 = vcvt.s32.f32 %v1205
        %v1214 = vcvt.s32.f32 %v1206
        %v1215 = vcvt.s32.f32 %v1207
        %v1216 = vcvt.s32.f32 %v1208
        %v1217 = vcvt.s32.f32 %v1209
        %1218 = vmatprep.subr.mxu0 0.0
        %1219 = vmatpush1.msra.mxu0 0.0
        %1220 = vmatprep.subr.mxu0 0.0
        %1221 = vmatpush1.msra.mxu0 0.0
        %1222 = vmatprep.subr.mxu0 0.0
        %1223 = vmatpush1.msra.mxu0 0.0
        %1224 = vmatprep.subr.mxu0 0.0
        %1225 = vmatpush1.msra.mxu0 0.0
        %1226 = vmatprep.subr.mxu0 0.0
        %1227 = vmatpush1.msra.mxu0 0.0
        %1228 = vmatprep.subr.mxu0 0.0
        %1229 = vmatpush1.msra.mxu0 0.0
        %1230 = vmatprep.subr.mxu0 0.0
        %1231 = vmatpush1.msra.mxu0 0.0
        %1232 = vmatprep.subr.mxu0 0.0
        %1233 = vmatpush1.msra.mxu0 0.0
        %1234 = vmatprep.subr.mxu0 0.0
        %1235 = vmatpush1.msra.mxu0 %v1217
        %1236 = vmatprep.subr.mxu0 0.0
        %1237 = vmatpush1.msra.mxu0 %v1216
        %1238 = vmatprep.subr.mxu0 0.0
        %1239 = vmatpush1.msra.mxu0 %v1215
        %1240 = vmatprep.subr.mxu0 0.0
        %1241 = vmatpush1.msra.mxu0 %v1214
        %1242 = vmatprep.subr.mxu0 0.0
        %1243 = vmatpush1.msra.mxu0 %v1213
        %1244 = vmatprep.subr.mxu0 0.0
        %1245 = vmatpush1.msra.mxu0 %v1212
        %1246 = vmatprep.subr.mxu0 0.0
        %1247 = vmatpush1.msra.mxu0 %v1211
        %1248 = vmatprep.subr.mxu0 0.0
        %1249 = vmatpush1.msra.mxu0 %v1210
        %1250 = vmatprep.subr.mxu0 0.0
        %1251 = vmatpush2.msra.mxu0 0.0
        %1252 = vmatprep.subr.mxu0 0.0
        %1253 = vmatpush2.msra.mxu0 0.0
        %1254 = vmatprep.subr.mxu0 0.0
        %1255 = vmatpush2.msra.mxu0 0.0
        %1256 = vmatprep.subr.mxu0 0.0
        %1257 = vmatpush2.msra.mxu0 0.0
        %1258 = vmatprep.subr.mxu0 0.0
        %1259 = vmatpush2.msra.mxu0 0.0
        %1260 = vmatprep.subr.mxu0 0.0
        %1261 = vmatpush2.msra.mxu0 0.0
        %1262 = vmatprep.subr.mxu0 0.0
        %1263 = vmatpush2.msra.mxu0 0.0
        %1264 = vmatprep.subr.mxu0 0.0
        %1265 = vmatpush2.msra.mxu0 0.0
        %1266 = vmatprep.subr.mxu0 0.0
        %1267 = vmatpush2.msra.mxu0 0.0
        %1268 = vmatprep.subr.mxu0 0.0
        %1269 = vmatpush2.msra.mxu0 0.0
        %1270 = vmatprep.subr.mxu0 0.0
        %1271 = vmatpush2.msra.mxu0 0.0
        %1272 = vmatprep.subr.mxu0 0.0
        %1273 = vmatpush2.msra.mxu0 0.0
        %1274 = vmatprep.subr.mxu0 0.0
        %1275 = vmatpush2.msra.mxu0 0.0
        %1276 = vmatprep.subr.mxu0 0.0
        %1277 = vmatpush2.msra.mxu0 0.0
        %1278 = vmatprep.subr.mxu0 0.0
        %1279 = vmatpush2.msra.mxu0 0.0
        %1280 = vmatprep.subr.mxu0 0.0
        %1281 = vmatpush2.msra.mxu0 0.0
        %1282 = vmatprep.mubr.f32.mxu0 0.0
        %1283 = vmatmul.mubr.f32.gmra.mxu0 %v538
        %v1284 = vpop.f32.mrf.mxu0
        %v1285 = vadd.f32 0.0, %v1284
        %v1286 = vpop.f32.mrf.mxu0
        %1287 = vmatprep.mubr.f32.mxu0 0.0
        %1288 = vmatmul.mubr.f32.gmra.mxu0 %v541
        %v1289 = vpop.f32.mrf.mxu0
        %v1290 = vadd.f32 0.0, %v1289
        %v1291 = vpop.f32.mrf.mxu0
        %1292 = vmatprep.mubr.f32.mxu0 0.0
        %1293 = vmatmul.mubr.f32.gmra.mxu0 %v544
        %v1294 = vpop.f32.mrf.mxu0
        %v1295 = vadd.f32 0.0, %v1294
        %v1296 = vpop.f32.mrf.mxu0
        %1297 = vmatprep.mubr.f32.mxu0 0.0
        %1298 = vmatmul.mubr.f32.gmra.mxu0 %v547
        %v1299 = vpop.f32.mrf.mxu0
        %v1300 = vadd.f32 0.0, %v1299
        %v1301 = vpop.f32.mrf.mxu0
        %1302 = vmatprep.mubr.f32.mxu0 0.0
        %1303 = vmatmul.mubr.f32.gmra.mxu0 %v550
        %v1304 = vpop.f32.mrf.mxu0
        %v1305 = vadd.f32 0.0, %v1304
        %v1306 = vpop.f32.mrf.mxu0
        %1307 = vmatprep.mubr.f32.mxu0 0.0
        %1308 = vmatmul.mubr.f32.gmra.mxu0 %v553
        %v1309 = vpop.f32.mrf.mxu0
        %v1310 = vadd.f32 0.0, %v1309
        %v1311 = vpop.f32.mrf.mxu0
        %1312 = vmatprep.mubr.f32.mxu0 0.0
        %1313 = vmatmul.mubr.f32.gmra.mxu0 %v556
        %v1314 = vpop.f32.mrf.mxu0
        %v1315 = vadd.f32 0.0, %v1314
        %v1316 = vpop.f32.mrf.mxu0
        %1317 = vmatprep.mubr.f32.mxu0 0.0
        %1318 = vmatmul.mubr.f32.gmra.mxu0 %v559
        %v1319 = vpop.f32.mrf.mxu0
        %v1320 = vadd.f32 0.0, %v1319
        %v1321 = vpop.f32.mrf.mxu0
        %1322 = vmatprep.mubr.f32.mxu0 0.0
        %1323 = vmatmul.mubr.f32.gmra.mxu0 %v562
        %v1324 = vpop.f32.mrf.mxu0
        %v1325 = vadd.f32 0.0, %v1324
        %v1326 = vpop.f32.mrf.mxu0
        %1327 = vmatprep.mubr.f32.mxu0 0.0
        %1328 = vmatmul.mubr.f32.gmra.mxu0 %v565
        %v1329 = vpop.f32.mrf.mxu0
        %v1330 = vadd.f32 0.0, %v1329
        %v1331 = vpop.f32.mrf.mxu0
        %1332 = vmatprep.mubr.f32.mxu0 0.0
        %1333 = vmatmul.mubr.f32.gmra.mxu0 %v568
        %v1334 = vpop.f32.mrf.mxu0
        %v1335 = vadd.f32 0.0, %v1334
        %v1336 = vpop.f32.mrf.mxu0
        %1337 = vmatprep.mubr.f32.mxu0 0.0
        %1338 = vmatmul.mubr.f32.gmra.mxu0 %v571
        %v1339 = vpop.f32.mrf.mxu0
        %v1340 = vadd.f32 0.0, %v1339
        %v1341 = vpop.f32.mrf.mxu0
        %1342 = vmatprep.mubr.f32.mxu0 0.0
        %1343 = vmatmul.mubr.f32.gmra.mxu0 %v574
        %v1344 = vpop.f32.mrf.mxu0
        %v1345 = vadd.f32 0.0, %v1344
        %v1346 = vpop.f32.mrf.mxu0
        %1347 = vmatprep.mubr.f32.mxu0 0.0
        %1348 = vmatmul.mubr.f32.gmra.mxu0 %v577
        %v1349 = vpop.f32.mrf.mxu0
        %v1350 = vadd.f32 0.0, %v1349
        %v1351 = vpop.f32.mrf.mxu0
        %1352 = vmatprep.mubr.f32.mxu0 0.0
        %1353 = vmatmul.mubr.f32.gmra.mxu0 %v580
        %v1354 = vpop.f32.mrf.mxu0
        %v1355 = vadd.f32 0.0, %v1354
        %v1356 = vpop.f32.mrf.mxu0
        %1357 = vmatprep.mubr.f32.mxu0 0.0
        %1358 = vmatmul.mubr.f32.gmra.mxu0 %v583
        %v1359 = vpop.f32.mrf.mxu0
        %v1360 = vadd.f32 0.0, %v1359
        %v1361 = vpop.f32.mrf.mxu0
        %1362 = vdwg.mxu0
        %v1363 = vmul.f32 %v430, %v1285
        %v1364 = vmul.f32 %v435, %v1290
        %v1365 = vmul.f32 %v440, %v1295
        %v1366 = vmul.f32 %v445, %v1300
        %v1367 = vmul.f32 %v450, %v1305
        %v1368 = vmul.f32 %v455, %v1310
        %v1369 = vmul.f32 %v460, %v1315
        %v1370 = vmul.f32 %v465, %v1320
        %v1371 = vmul.f32 %v470, %v1325
        %v1372 = vmul.f32 %v475, %v1330
        %v1373 = vmul.f32 %v480, %v1335
        %v1374 = vmul.f32 %v485, %v1340
        %v1375 = vmul.f32 %v490, %v1345
        %v1376 = vmul.f32 %v495, %v1350
        %v1377 = vmul.f32 %v500, %v1355
        %v1378 = vmul.f32 %v505, %v1360
        %v1379 = vadd.f32 %v1363, %v1364
        %v1380 = vadd.f32 %v1379, %v1365
        %v1381 = vadd.f32 %v1380, %v1366
        %v1382 = vadd.f32 %v1381, %v1367
        %v1383 = vadd.f32 %v1382, %v1368
        %v1384 = vadd.f32 %v1383, %v1369
        %v1385 = vadd.f32 %v1384, %v1370
        %v1386 = vadd.f32 %v1385, %v1371
        %v1387 = vadd.f32 %v1386, %v1372
        %v1388 = vadd.f32 %v1387, %v1373
        %v1389 = vadd.f32 %v1388, %v1374
        %v1390 = vadd.f32 %v1389, %v1375
        %v1391 = vadd.f32 %v1390, %v1376
        %v1392 = vadd.f32 %v1391, %v1377
        %v1393 = vadd.f32 %v1392, %v1378
        %v1394 = vrot.slane %v1393, 4
        %v1395 = vadd.f32 %v1393, %v1394
        %v1396 = vrot.slane %v1395, 2
        %v1397 = vadd.f32 %v1395, %v1396
        %v1398 = vrot.slane %v1397, 1
        %v1399 = vadd.f32 %v1397, %v1398
        %v1400 = vld [vmem:[%s243 + $0x3] sm:$0x1]
        %v1401 = vlaneseq
        %v1402 = vshrl.u32 %v1401, 7
        %v1403 = vsub.s32 0, %v1402
        %v1404 = vrot.slane %v1400, %v1403
        %vm1405 = vcmp.eq.s32.totalorder %v1404, %v245
        %vm1406 = vcmp.eq.s32.totalorder %v1404, %v246
        %vm1407 = vcmp.eq.s32.totalorder %v1404, %v247
        %vm1408 = vcmp.eq.s32.totalorder %v1404, %v248
        %vm1409 = vcmp.eq.s32.totalorder %v1404, %v249
        %vm1410 = vcmp.eq.s32.totalorder %v1404, %v250
        %vm1411 = vcmp.eq.s32.totalorder %v1404, %v251
        %vm1412 = vcmp.eq.s32.totalorder %v1404, %v252
        %v1413 = vsel %vm1405, 1, 0
        %v1414 = vsel %vm1406, 1, 0
        %v1415 = vsel %vm1407, 1, 0
        %v1416 = vsel %vm1408, 1, 0
        %v1417 = vsel %vm1409, 1, 0
        %v1418 = vsel %vm1410, 1, 0
        %v1419 = vsel %vm1411, 1, 0
        %v1420 = vsel %vm1412, 1, 0
        %v1421 = vcvt.s32.f32 %v1413
        %v1422 = vcvt.s32.f32 %v1414
        %v1423 = vcvt.s32.f32 %v1415
        %v1424 = vcvt.s32.f32 %v1416
        %v1425 = vcvt.s32.f32 %v1417
        %v1426 = vcvt.s32.f32 %v1418
        %v1427 = vcvt.s32.f32 %v1419
        %v1428 = vcvt.s32.f32 %v1420
        %1429 = vmatprep.subr.mxu0 0.0
        %1430 = vmatpush1.msra.mxu0 0.0
        %1431 = vmatprep.subr.mxu0 0.0
        %1432 = vmatpush1.msra.mxu0 0.0
        %1433 = vmatprep.subr.mxu0 0.0
        %1434 = vmatpush1.msra.mxu0 0.0
        %1435 = vmatprep.subr.mxu0 0.0
        %1436 = vmatpush1.msra.mxu0 0.0
        %1437 = vmatprep.subr.mxu0 0.0
        %1438 = vmatpush1.msra.mxu0 0.0
        %1439 = vmatprep.subr.mxu0 0.0
        %1440 = vmatpush1.msra.mxu0 0.0
        %1441 = vmatprep.subr.mxu0 0.0
        %1442 = vmatpush1.msra.mxu0 0.0
        %1443 = vmatprep.subr.mxu0 0.0
        %1444 = vmatpush1.msra.mxu0 0.0
        %1445 = vmatprep.subr.mxu0 0.0
        %1446 = vmatpush1.msra.mxu0 %v1428
        %1447 = vmatprep.subr.mxu0 0.0
        %1448 = vmatpush1.msra.mxu0 %v1427
        %1449 = vmatprep.subr.mxu0 0.0
        %1450 = vmatpush1.msra.mxu0 %v1426
        %1451 = vmatprep.subr.mxu0 0.0
        %1452 = vmatpush1.msra.mxu0 %v1425
        %1453 = vmatprep.subr.mxu0 0.0
        %1454 = vmatpush1.msra.mxu0 %v1424
        %1455 = vmatprep.subr.mxu0 0.0
        %1456 = vmatpush1.msra.mxu0 %v1423
        %1457 = vmatprep.subr.mxu0 0.0
        %1458 = vmatpush1.msra.mxu0 %v1422
        %1459 = vmatprep.subr.mxu0 0.0
        %1460 = vmatpush1.msra.mxu0 %v1421
        %1461 = vmatprep.subr.mxu0 0.0
        %1462 = vmatpush2.msra.mxu0 0.0
        %1463 = vmatprep.subr.mxu0 0.0
        %1464 = vmatpush2.msra.mxu0 0.0
        %1465 = vmatprep.subr.mxu0 0.0
        %1466 = vmatpush2.msra.mxu0 0.0
        %1467 = vmatprep.subr.mxu0 0.0
        %1468 = vmatpush2.msra.mxu0 0.0
        %1469 = vmatprep.subr.mxu0 0.0
        %1470 = vmatpush2.msra.mxu0 0.0
        %1471 = vmatprep.subr.mxu0 0.0
        %1472 = vmatpush2.msra.mxu0 0.0
        %1473 = vmatprep.subr.mxu0 0.0
        %1474 = vmatpush2.msra.mxu0 0.0
        %1475 = vmatprep.subr.mxu0 0.0
        %1476 = vmatpush2.msra.mxu0 0.0
        %1477 = vmatprep.subr.mxu0 0.0
        %1478 = vmatpush2.msra.mxu0 0.0
        %1479 = vmatprep.subr.mxu0 0.0
        %1480 = vmatpush2.msra.mxu0 0.0
        %1481 = vmatprep.subr.mxu0 0.0
        %1482 = vmatpush2.msra.mxu0 0.0
        %1483 = vmatprep.subr.mxu0 0.0
        %1484 = vmatpush2.msra.mxu0 0.0
        %1485 = vmatprep.subr.mxu0 0.0
        %1486 = vmatpush2.msra.mxu0 0.0
        %1487 = vmatprep.subr.mxu0 0.0
        %1488 = vmatpush2.msra.mxu0 0.0
        %1489 = vmatprep.subr.mxu0 0.0
        %1490 = vmatpush2.msra.mxu0 0.0
        %1491 = vmatprep.subr.mxu0 0.0
        %1492 = vmatpush2.msra.mxu0 0.0
        %1493 = vmatprep.mubr.f32.mxu0 0.0
        %1494 = vmatmul.mubr.f32.gmra.mxu0 %v538
        %v1495 = vpop.f32.mrf.mxu0
        %v1496 = vadd.f32 0.0, %v1495
        %v1497 = vpop.f32.mrf.mxu0
        %1498 = vmatprep.mubr.f32.mxu0 0.0
        %1499 = vmatmul.mubr.f32.gmra.mxu0 %v541
        %v1500 = vpop.f32.mrf.mxu0
        %v1501 = vadd.f32 0.0, %v1500
        %v1502 = vpop.f32.mrf.mxu0
        %1503 = vmatprep.mubr.f32.mxu0 0.0
        %1504 = vmatmul.mubr.f32.gmra.mxu0 %v544
        %v1505 = vpop.f32.mrf.mxu0
        %v1506 = vadd.f32 0.0, %v1505
        %v1507 = vpop.f32.mrf.mxu0
        %1508 = vmatprep.mubr.f32.mxu0 0.0
        %1509 = vmatmul.mubr.f32.gmra.mxu0 %v547
        %v1510 = vpop.f32.mrf.mxu0
        %v1511 = vadd.f32 0.0, %v1510
        %v1512 = vpop.f32.mrf.mxu0
        %1513 = vmatprep.mubr.f32.mxu0 0.0
        %1514 = vmatmul.mubr.f32.gmra.mxu0 %v550
        %v1515 = vpop.f32.mrf.mxu0
        %v1516 = vadd.f32 0.0, %v1515
        %v1517 = vpop.f32.mrf.mxu0
        %1518 = vmatprep.mubr.f32.mxu0 0.0
        %1519 = vmatmul.mubr.f32.gmra.mxu0 %v553
        %v1520 = vpop.f32.mrf.mxu0
        %v1521 = vadd.f32 0.0, %v1520
        %v1522 = vpop.f32.mrf.mxu0
        %1523 = vmatprep.mubr.f32.mxu0 0.0
        %1524 = vmatmul.mubr.f32.gmra.mxu0 %v556
        %v1525 = vpop.f32.mrf.mxu0
        %v1526 = vadd.f32 0.0, %v1525
        %v1527 = vpop.f32.mrf.mxu0
        %1528 = vmatprep.mubr.f32.mxu0 0.0
        %1529 = vmatmul.mubr.f32.gmra.mxu0 %v559
        %v1530 = vpop.f32.mrf.mxu0
        %v1531 = vadd.f32 0.0, %v1530
        %v1532 = vpop.f32.mrf.mxu0
        %1533 = vmatprep.mubr.f32.mxu0 0.0
        %1534 = vmatmul.mubr.f32.gmra.mxu0 %v562
        %v1535 = vpop.f32.mrf.mxu0
        %v1536 = vadd.f32 0.0, %v1535
        %v1537 = vpop.f32.mrf.mxu0
        %1538 = vmatprep.mubr.f32.mxu0 0.0
        %1539 = vmatmul.mubr.f32.gmra.mxu0 %v565
        %v1540 = vpop.f32.mrf.mxu0
        %v1541 = vadd.f32 0.0, %v1540
        %v1542 = vpop.f32.mrf.mxu0
        %1543 = vmatprep.mubr.f32.mxu0 0.0
        %1544 = vmatmul.mubr.f32.gmra.mxu0 %v568
        %v1545 = vpop.f32.mrf.mxu0
        %v1546 = vadd.f32 0.0, %v1545
        %v1547 = vpop.f32.mrf.mxu0
        %1548 = vmatprep.mubr.f32.mxu0 0.0
        %1549 = vmatmul.mubr.f32.gmra.mxu0 %v571
        %v1550 = vpop.f32.mrf.mxu0
        %v1551 = vadd.f32 0.0, %v1550
        %v1552 = vpop.f32.mrf.mxu0
        %1553 = vmatprep.mubr.f32.mxu0 0.0
        %1554 = vmatmul.mubr.f32.gmra.mxu0 %v574
        %v1555 = vpop.f32.mrf.mxu0
        %v1556 = vadd.f32 0.0, %v1555
        %v1557 = vpop.f32.mrf.mxu0
        %1558 = vmatprep.mubr.f32.mxu0 0.0
        %1559 = vmatmul.mubr.f32.gmra.mxu0 %v577
        %v1560 = vpop.f32.mrf.mxu0
        %v1561 = vadd.f32 0.0, %v1560
        %v1562 = vpop.f32.mrf.mxu0
        %1563 = vmatprep.mubr.f32.mxu0 0.0
        %1564 = vmatmul.mubr.f32.gmra.mxu0 %v580
        %v1565 = vpop.f32.mrf.mxu0
        %v1566 = vadd.f32 0.0, %v1565
        %v1567 = vpop.f32.mrf.mxu0
        %1568 = vmatprep.mubr.f32.mxu0 0.0
        %1569 = vmatmul.mubr.f32.gmra.mxu0 %v583
        %v1570 = vpop.f32.mrf.mxu0
        %v1571 = vadd.f32 0.0, %v1570
        %v1572 = vpop.f32.mrf.mxu0
        %1573 = vdwg.mxu0
        %v1574 = vmul.f32 %v430, %v1496
        %v1575 = vmul.f32 %v435, %v1501
        %v1576 = vmul.f32 %v440, %v1506
        %v1577 = vmul.f32 %v445, %v1511
        %v1578 = vmul.f32 %v450, %v1516
        %v1579 = vmul.f32 %v455, %v1521
        %v1580 = vmul.f32 %v460, %v1526
        %v1581 = vmul.f32 %v465, %v1531
        %v1582 = vmul.f32 %v470, %v1536
        %v1583 = vmul.f32 %v475, %v1541
        %v1584 = vmul.f32 %v480, %v1546
        %v1585 = vmul.f32 %v485, %v1551
        %v1586 = vmul.f32 %v490, %v1556
        %v1587 = vmul.f32 %v495, %v1561
        %v1588 = vmul.f32 %v500, %v1566
        %v1589 = vmul.f32 %v505, %v1571
        %v1590 = vadd.f32 %v1574, %v1575
        %v1591 = vadd.f32 %v1590, %v1576
        %v1592 = vadd.f32 %v1591, %v1577
        %v1593 = vadd.f32 %v1592, %v1578
        %v1594 = vadd.f32 %v1593, %v1579
        %v1595 = vadd.f32 %v1594, %v1580
        %v1596 = vadd.f32 %v1595, %v1581
        %v1597 = vadd.f32 %v1596, %v1582
        %v1598 = vadd.f32 %v1597, %v1583
        %v1599 = vadd.f32 %v1598, %v1584
        %v1600 = vadd.f32 %v1599, %v1585
        %v1601 = vadd.f32 %v1600, %v1586
        %v1602 = vadd.f32 %v1601, %v1587
        %v1603 = vadd.f32 %v1602, %v1588
        %v1604 = vadd.f32 %v1603, %v1589
        %v1605 = vrot.slane %v1604, 4
        %v1606 = vadd.f32 %v1604, %v1605
        %v1607 = vrot.slane %v1606, 2
        %v1608 = vadd.f32 %v1606, %v1607
        %v1609 = vrot.slane %v1608, 1
        %v1610 = vadd.f32 %v1608, %v1609
        %v1611 = vld [vmem:[%s243 + $0x4] sm:$0x1]
        %v1612 = vlaneseq
        %v1613 = vshrl.u32 %v1612, 7
        %v1614 = vsub.s32 0, %v1613
        %v1615 = vrot.slane %v1611, %v1614
        %vm1616 = vcmp.eq.s32.totalorder %v1615, %v245
        %vm1617 = vcmp.eq.s32.totalorder %v1615, %v246
        %vm1618 = vcmp.eq.s32.totalorder %v1615, %v247
        %vm1619 = vcmp.eq.s32.totalorder %v1615, %v248
        %vm1620 = vcmp.eq.s32.totalorder %v1615, %v249
        %vm1621 = vcmp.eq.s32.totalorder %v1615, %v250
        %vm1622 = vcmp.eq.s32.totalorder %v1615, %v251
        %vm1623 = vcmp.eq.s32.totalorder %v1615, %v252
        %v1624 = vsel %vm1616, 1, 0
        %v1625 = vsel %vm1617, 1, 0
        %v1626 = vsel %vm1618, 1, 0
        %v1627 = vsel %vm1619, 1, 0
        %v1628 = vsel %vm1620, 1, 0
        %v1629 = vsel %vm1621, 1, 0
        %v1630 = vsel %vm1622, 1, 0
        %v1631 = vsel %vm1623, 1, 0
        %v1632 = vcvt.s32.f32 %v1624
        %v1633 = vcvt.s32.f32 %v1625
        %v1634 = vcvt.s32.f32 %v1626
        %v1635 = vcvt.s32.f32 %v1627
        %v1636 = vcvt.s32.f32 %v1628
        %v1637 = vcvt.s32.f32 %v1629
        %v1638 = vcvt.s32.f32 %v1630
        %v1639 = vcvt.s32.f32 %v1631
        %1640 = vmatprep.subr.mxu0 0.0
        %1641 = vmatpush1.msra.mxu0 0.0
        %1642 = vmatprep.subr.mxu0 0.0
        %1643 = vmatpush1.msra.mxu0 0.0
        %1644 = vmatprep.subr.mxu0 0.0
        %1645 = vmatpush1.msra.mxu0 0.0
        %1646 = vmatprep.subr.mxu0 0.0
        %1647 = vmatpush1.msra.mxu0 0.0
        %1648 = vmatprep.subr.mxu0 0.0
        %1649 = vmatpush1.msra.mxu0 0.0
        %1650 = vmatprep.subr.mxu0 0.0
        %1651 = vmatpush1.msra.mxu0 0.0
        %1652 = vmatprep.subr.mxu0 0.0
        %1653 = vmatpush1.msra.mxu0 0.0
        %1654 = vmatprep.subr.mxu0 0.0
        %1655 = vmatpush1.msra.mxu0 0.0
        %1656 = vmatprep.subr.mxu0 0.0
        %1657 = vmatpush1.msra.mxu0 %v1639
        %1658 = vmatprep.subr.mxu0 0.0
        %1659 = vmatpush1.msra.mxu0 %v1638
        %1660 = vmatprep.subr.mxu0 0.0
        %1661 = vmatpush1.msra.mxu0 %v1637
        %1662 = vmatprep.subr.mxu0 0.0
        %1663 = vmatpush1.msra.mxu0 %v1636
        %1664 = vmatprep.subr.mxu0 0.0
        %1665 = vmatpush1.msra.mxu0 %v1635
        %1666 = vmatprep.subr.mxu0 0.0
        %1667 = vmatpush1.msra.mxu0 %v1634
        %1668 = vmatprep.subr.mxu0 0.0
        %1669 = vmatpush1.msra.mxu0 %v1633
        %1670 = vmatprep.subr.mxu0 0.0
        %1671 = vmatpush1.msra.mxu0 %v1632
        %1672 = vmatprep.subr.mxu0 0.0
        %1673 = vmatpush2.msra.mxu0 0.0
        %1674 = vmatprep.subr.mxu0 0.0
        %1675 = vmatpush2.msra.mxu0 0.0
        %1676 = vmatprep.subr.mxu0 0.0
        %1677 = vmatpush2.msra.mxu0 0.0
        %1678 = vmatprep.subr.mxu0 0.0
        %1679 = vmatpush2.msra.mxu0 0.0
        %1680 = vmatprep.subr.mxu0 0.0
        %1681 = vmatpush2.msra.mxu0 0.0
        %1682 = vmatprep.subr.mxu0 0.0
        %1683 = vmatpush2.msra.mxu0 0.0
        %1684 = vmatprep.subr.mxu0 0.0
        %1685 = vmatpush2.msra.mxu0 0.0
        %1686 = vmatprep.subr.mxu0 0.0
        %1687 = vmatpush2.msra.mxu0 0.0
        %1688 = vmatprep.subr.mxu0 0.0
        %1689 = vmatpush2.msra.mxu0 0.0
        %1690 = vmatprep.subr.mxu0 0.0
        %1691 = vmatpush2.msra.mxu0 0.0
        %1692 = vmatprep.subr.mxu0 0.0
        %1693 = vmatpush2.msra.mxu0 0.0
        %1694 = vmatprep.subr.mxu0 0.0
        %1695 = vmatpush2.msra.mxu0 0.0
        %1696 = vmatprep.subr.mxu0 0.0
        %1697 = vmatpush2.msra.mxu0 0.0
        %1698 = vmatprep.subr.mxu0 0.0
        %1699 = vmatpush2.msra.mxu0 0.0
        %1700 = vmatprep.subr.mxu0 0.0
        %1701 = vmatpush2.msra.mxu0 0.0
        %1702 = vmatprep.subr.mxu0 0.0
        %1703 = vmatpush2.msra.mxu0 0.0
        %1704 = vmatprep.mubr.f32.mxu0 0.0
        %1705 = vmatmul.mubr.f32.gmra.mxu0 %v538
        %v1706 = vpop.f32.mrf.mxu0
        %v1707 = vadd.f32 0.0, %v1706
        %v1708 = vpop.f32.mrf.mxu0
        %1709 = vmatprep.mubr.f32.mxu0 0.0
        %1710 = vmatmul.mubr.f32.gmra.mxu0 %v541
        %v1711 = vpop.f32.mrf.mxu0
        %v1712 = vadd.f32 0.0, %v1711
        %v1713 = vpop.f32.mrf.mxu0
        %1714 = vmatprep.mubr.f32.mxu0 0.0
        %1715 = vmatmul.mubr.f32.gmra.mxu0 %v544
        %v1716 = vpop.f32.mrf.mxu0
        %v1717 = vadd.f32 0.0, %v1716
        %v1718 = vpop.f32.mrf.mxu0
        %1719 = vmatprep.mubr.f32.mxu0 0.0
        %1720 = vmatmul.mubr.f32.gmra.mxu0 %v547
        %v1721 = vpop.f32.mrf.mxu0
        %v1722 = vadd.f32 0.0, %v1721
        %v1723 = vpop.f32.mrf.mxu0
        %1724 = vmatprep.mubr.f32.mxu0 0.0
        %1725 = vmatmul.mubr.f32.gmra.mxu0 %v550
        %v1726 = vpop.f32.mrf.mxu0
        %v1727 = vadd.f32 0.0, %v1726
        %v1728 = vpop.f32.mrf.mxu0
        %1729 = vmatprep.mubr.f32.mxu0 0.0
        %1730 = vmatmul.mubr.f32.gmra.mxu0 %v553
        %v1731 = vpop.f32.mrf.mxu0
        %v1732 = vadd.f32 0.0, %v1731
        %v1733 = vpop.f32.mrf.mxu0
        %1734 = vmatprep.mubr.f32.mxu0 0.0
        %1735 = vmatmul.mubr.f32.gmra.mxu0 %v556
        %v1736 = vpop.f32.mrf.mxu0
        %v1737 = vadd.f32 0.0, %v1736
        %v1738 = vpop.f32.mrf.mxu0
        %1739 = vmatprep.mubr.f32.mxu0 0.0
        %1740 = vmatmul.mubr.f32.gmra.mxu0 %v559
        %v1741 = vpop.f32.mrf.mxu0
        %v1742 = vadd.f32 0.0, %v1741
        %v1743 = vpop.f32.mrf.mxu0
        %1744 = vmatprep.mubr.f32.mxu0 0.0
        %1745 = vmatmul.mubr.f32.gmra.mxu0 %v562
        %v1746 = vpop.f32.mrf.mxu0
        %v1747 = vadd.f32 0.0, %v1746
        %v1748 = vpop.f32.mrf.mxu0
        %1749 = vmatprep.mubr.f32.mxu0 0.0
        %1750 = vmatmul.mubr.f32.gmra.mxu0 %v565
        %v1751 = vpop.f32.mrf.mxu0
        %v1752 = vadd.f32 0.0, %v1751
        %v1753 = vpop.f32.mrf.mxu0
        %1754 = vmatprep.mubr.f32.mxu0 0.0
        %1755 = vmatmul.mubr.f32.gmra.mxu0 %v568
        %v1756 = vpop.f32.mrf.mxu0
        %v1757 = vadd.f32 0.0, %v1756
        %v1758 = vpop.f32.mrf.mxu0
        %1759 = vmatprep.mubr.f32.mxu0 0.0
        %1760 = vmatmul.mubr.f32.gmra.mxu0 %v571
        %v1761 = vpop.f32.mrf.mxu0
        %v1762 = vadd.f32 0.0, %v1761
        %v1763 = vpop.f32.mrf.mxu0
        %1764 = vmatprep.mubr.f32.mxu0 0.0
        %1765 = vmatmul.mubr.f32.gmra.mxu0 %v574
        %v1766 = vpop.f32.mrf.mxu0
        %v1767 = vadd.f32 0.0, %v1766
        %v1768 = vpop.f32.mrf.mxu0
        %1769 = vmatprep.mubr.f32.mxu0 0.0
        %1770 = vmatmul.mubr.f32.gmra.mxu0 %v577
        %v1771 = vpop.f32.mrf.mxu0
        %v1772 = vadd.f32 0.0, %v1771
        %v1773 = vpop.f32.mrf.mxu0
        %1774 = vmatprep.mubr.f32.mxu0 0.0
        %1775 = vmatmul.mubr.f32.gmra.mxu0 %v580
        %v1776 = vpop.f32.mrf.mxu0
        %v1777 = vadd.f32 0.0, %v1776
        %v1778 = vpop.f32.mrf.mxu0
        %1779 = vmatprep.mubr.f32.mxu0 0.0
        %1780 = vmatmul.mubr.f32.gmra.mxu0 %v583
        %v1781 = vpop.f32.mrf.mxu0
        %v1782 = vadd.f32 0.0, %v1781
        %v1783 = vpop.f32.mrf.mxu0
        %1784 = vdwg.mxu0
        %v1785 = vmul.f32 %v430, %v1707
        %v1786 = vmul.f32 %v435, %v1712
        %v1787 = vmul.f32 %v440, %v1717
        %v1788 = vmul.f32 %v445, %v1722
        %v1789 = vmul.f32 %v450, %v1727
        %v1790 = vmul.f32 %v455, %v1732
        %v1791 = vmul.f32 %v460, %v1737
        %v1792 = vmul.f32 %v465, %v1742
        %v1793 = vmul.f32 %v470, %v1747
        %v1794 = vmul.f32 %v475, %v1752
        %v1795 = vmul.f32 %v480, %v1757
        %v1796 = vmul.f32 %v485, %v1762
        %v1797 = vmul.f32 %v490, %v1767
        %v1798 = vmul.f32 %v495, %v1772
        %v1799 = vmul.f32 %v500, %v1777
        %v1800 = vmul.f32 %v505, %v1782
        %v1801 = vadd.f32 %v1785, %v1786
        %v1802 = vadd.f32 %v1801, %v1787
        %v1803 = vadd.f32 %v1802, %v1788
        %v1804 = vadd.f32 %v1803, %v1789
        %v1805 = vadd.f32 %v1804, %v1790
        %v1806 = vadd.f32 %v1805, %v1791
        %v1807 = vadd.f32 %v1806, %v1792
        %v1808 = vadd.f32 %v1807, %v1793
        %v1809 = vadd.f32 %v1808, %v1794
        %v1810 = vadd.f32 %v1809, %v1795
        %v1811 = vadd.f32 %v1810, %v1796
        %v1812 = vadd.f32 %v1811, %v1797
        %v1813 = vadd.f32 %v1812, %v1798
        %v1814 = vadd.f32 %v1813, %v1799
        %v1815 = vadd.f32 %v1814, %v1800
        %v1816 = vrot.slane %v1815, 4
        %v1817 = vadd.f32 %v1815, %v1816
        %v1818 = vrot.slane %v1817, 2
        %v1819 = vadd.f32 %v1817, %v1818
        %v1820 = vrot.slane %v1819, 1
        %v1821 = vadd.f32 %v1819, %v1820
        %v1822 = vld [vmem:[%s243 + $0x5] sm:$0x1]
        %v1823 = vlaneseq
        %v1824 = vshrl.u32 %v1823, 7
        %v1825 = vsub.s32 0, %v1824
        %v1826 = vrot.slane %v1822, %v1825
        %vm1827 = vcmp.eq.s32.totalorder %v1826, %v245
        %vm1828 = vcmp.eq.s32.totalorder %v1826, %v246
        %vm1829 = vcmp.eq.s32.totalorder %v1826, %v247
        %vm1830 = vcmp.eq.s32.totalorder %v1826, %v248
        %vm1831 = vcmp.eq.s32.totalorder %v1826, %v249
        %vm1832 = vcmp.eq.s32.totalorder %v1826, %v250
        %vm1833 = vcmp.eq.s32.totalorder %v1826, %v251
        %vm1834 = vcmp.eq.s32.totalorder %v1826, %v252
        %v1835 = vsel %vm1827, 1, 0
        %v1836 = vsel %vm1828, 1, 0
        %v1837 = vsel %vm1829, 1, 0
        %v1838 = vsel %vm1830, 1, 0
        %v1839 = vsel %vm1831, 1, 0
        %v1840 = vsel %vm1832, 1, 0
        %v1841 = vsel %vm1833, 1, 0
        %v1842 = vsel %vm1834, 1, 0
        %v1843 = vcvt.s32.f32 %v1835
        %v1844 = vcvt.s32.f32 %v1836
        %v1845 = vcvt.s32.f32 %v1837
        %v1846 = vcvt.s32.f32 %v1838
        %v1847 = vcvt.s32.f32 %v1839
        %v1848 = vcvt.s32.f32 %v1840
        %v1849 = vcvt.s32.f32 %v1841
        %v1850 = vcvt.s32.f32 %v1842
        %1851 = vmatprep.subr.mxu0 0.0
        %1852 = vmatpush1.msra.mxu0 0.0
        %1853 = vmatprep.subr.mxu0 0.0
        %1854 = vmatpush1.msra.mxu0 0.0
        %1855 = vmatprep.subr.mxu0 0.0
        %1856 = vmatpush1.msra.mxu0 0.0
        %1857 = vmatprep.subr.mxu0 0.0
        %1858 = vmatpush1.msra.mxu0 0.0
        %1859 = vmatprep.subr.mxu0 0.0
        %1860 = vmatpush1.msra.mxu0 0.0
        %1861 = vmatprep.subr.mxu0 0.0
        %1862 = vmatpush1.msra.mxu0 0.0
        %1863 = vmatprep.subr.mxu0 0.0
        %1864 = vmatpush1.msra.mxu0 0.0
        %1865 = vmatprep.subr.mxu0 0.0
        %1866 = vmatpush1.msra.mxu0 0.0
        %1867 = vmatprep.subr.mxu0 0.0
        %1868 = vmatpush1.msra.mxu0 %v1850
        %1869 = vmatprep.subr.mxu0 0.0
        %1870 = vmatpush1.msra.mxu0 %v1849
        %1871 = vmatprep.subr.mxu0 0.0
        %1872 = vmatpush1.msra.mxu0 %v1848
        %1873 = vmatprep.subr.mxu0 0.0
        %1874 = vmatpush1.msra.mxu0 %v1847
        %1875 = vmatprep.subr.mxu0 0.0
        %1876 = vmatpush1.msra.mxu0 %v1846
        %1877 = vmatprep.subr.mxu0 0.0
        %1878 = vmatpush1.msra.mxu0 %v1845
        %1879 = vmatprep.subr.mxu0 0.0
        %1880 = vmatpush1.msra.mxu0 %v1844
        %1881 = vmatprep.subr.mxu0 0.0
        %1882 = vmatpush1.msra.mxu0 %v1843
        %1883 = vmatprep.subr.mxu0 0.0
        %1884 = vmatpush2.msra.mxu0 0.0
        %1885 = vmatprep.subr.mxu0 0.0
        %1886 = vmatpush2.msra.mxu0 0.0
        %1887 = vmatprep.subr.mxu0 0.0
        %1888 = vmatpush2.msra.mxu0 0.0
        %1889 = vmatprep.subr.mxu0 0.0
        %1890 = vmatpush2.msra.mxu0 0.0
        %1891 = vmatprep.subr.mxu0 0.0
        %1892 = vmatpush2.msra.mxu0 0.0
        %1893 = vmatprep.subr.mxu0 0.0
        %1894 = vmatpush2.msra.mxu0 0.0
        %1895 = vmatprep.subr.mxu0 0.0
        %1896 = vmatpush2.msra.mxu0 0.0
        %1897 = vmatprep.subr.mxu0 0.0
        %1898 = vmatpush2.msra.mxu0 0.0
        %1899 = vmatprep.subr.mxu0 0.0
        %1900 = vmatpush2.msra.mxu0 0.0
        %1901 = vmatprep.subr.mxu0 0.0
        %1902 = vmatpush2.msra.mxu0 0.0
        %1903 = vmatprep.subr.mxu0 0.0
        %1904 = vmatpush2.msra.mxu0 0.0
        %1905 = vmatprep.subr.mxu0 0.0
        %1906 = vmatpush2.msra.mxu0 0.0
        %1907 = vmatprep.subr.mxu0 0.0
        %1908 = vmatpush2.msra.mxu0 0.0
        %1909 = vmatprep.subr.mxu0 0.0
        %1910 = vmatpush2.msra.mxu0 0.0
        %1911 = vmatprep.subr.mxu0 0.0
        %1912 = vmatpush2.msra.mxu0 0.0
        %1913 = vmatprep.subr.mxu0 0.0
        %1914 = vmatpush2.msra.mxu0 0.0
        %1915 = vmatprep.mubr.f32.mxu0 0.0
        %1916 = vmatmul.mubr.f32.gmra.mxu0 %v538
        %v1917 = vpop.f32.mrf.mxu0
        %v1918 = vadd.f32 0.0, %v1917
        %v1919 = vpop.f32.mrf.mxu0
        %1920 = vmatprep.mubr.f32.mxu0 0.0
        %1921 = vmatmul.mubr.f32.gmra.mxu0 %v541
        %v1922 = vpop.f32.mrf.mxu0
        %v1923 = vadd.f32 0.0, %v1922
        %v1924 = vpop.f32.mrf.mxu0
        %1925 = vmatprep.mubr.f32.mxu0 0.0
        %1926 = vmatmul.mubr.f32.gmra.mxu0 %v544
        %v1927 = vpop.f32.mrf.mxu0
        %v1928 = vadd.f32 0.0, %v1927
        %v1929 = vpop.f32.mrf.mxu0
        %1930 = vmatprep.mubr.f32.mxu0 0.0
        %1931 = vmatmul.mubr.f32.gmra.mxu0 %v547
        %v1932 = vpop.f32.mrf.mxu0
        %v1933 = vadd.f32 0.0, %v1932
        %v1934 = vpop.f32.mrf.mxu0
        %1935 = vmatprep.mubr.f32.mxu0 0.0
        %1936 = vmatmul.mubr.f32.gmra.mxu0 %v550
        %v1937 = vpop.f32.mrf.mxu0
        %v1938 = vadd.f32 0.0, %v1937
        %v1939 = vpop.f32.mrf.mxu0
        %1940 = vmatprep.mubr.f32.mxu0 0.0
        %1941 = vmatmul.mubr.f32.gmra.mxu0 %v553
        %v1942 = vpop.f32.mrf.mxu0
        %v1943 = vadd.f32 0.0, %v1942
        %v1944 = vpop.f32.mrf.mxu0
        %1945 = vmatprep.mubr.f32.mxu0 0.0
        %1946 = vmatmul.mubr.f32.gmra.mxu0 %v556
        %v1947 = vpop.f32.mrf.mxu0
        %v1948 = vadd.f32 0.0, %v1947
        %v1949 = vpop.f32.mrf.mxu0
        %1950 = vmatprep.mubr.f32.mxu0 0.0
        %1951 = vmatmul.mubr.f32.gmra.mxu0 %v559
        %v1952 = vpop.f32.mrf.mxu0
        %v1953 = vadd.f32 0.0, %v1952
        %v1954 = vpop.f32.mrf.mxu0
        %1955 = vmatprep.mubr.f32.mxu0 0.0
        %1956 = vmatmul.mubr.f32.gmra.mxu0 %v562
        %v1957 = vpop.f32.mrf.mxu0
        %v1958 = vadd.f32 0.0, %v1957
        %v1959 = vpop.f32.mrf.mxu0
        %1960 = vmatprep.mubr.f32.mxu0 0.0
        %1961 = vmatmul.mubr.f32.gmra.mxu0 %v565
        %v1962 = vpop.f32.mrf.mxu0
        %v1963 = vadd.f32 0.0, %v1962
        %v1964 = vpop.f32.mrf.mxu0
        %1965 = vmatprep.mubr.f32.mxu0 0.0
        %1966 = vmatmul.mubr.f32.gmra.mxu0 %v568
        %v1967 = vpop.f32.mrf.mxu0
        %v1968 = vadd.f32 0.0, %v1967
        %v1969 = vpop.f32.mrf.mxu0
        %1970 = vmatprep.mubr.f32.mxu0 0.0
        %1971 = vmatmul.mubr.f32.gmra.mxu0 %v571
        %v1972 = vpop.f32.mrf.mxu0
        %v1973 = vadd.f32 0.0, %v1972
        %v1974 = vpop.f32.mrf.mxu0
        %1975 = vmatprep.mubr.f32.mxu0 0.0
        %1976 = vmatmul.mubr.f32.gmra.mxu0 %v574
        %v1977 = vpop.f32.mrf.mxu0
        %v1978 = vadd.f32 0.0, %v1977
        %v1979 = vpop.f32.mrf.mxu0
        %1980 = vmatprep.mubr.f32.mxu0 0.0
        %1981 = vmatmul.mubr.f32.gmra.mxu0 %v577
        %v1982 = vpop.f32.mrf.mxu0
        %v1983 = vadd.f32 0.0, %v1982
        %v1984 = vpop.f32.mrf.mxu0
        %1985 = vmatprep.mubr.f32.mxu0 0.0
        %1986 = vmatmul.mubr.f32.gmra.mxu0 %v580
        %v1987 = vpop.f32.mrf.mxu0
        %v1988 = vadd.f32 0.0, %v1987
        %v1989 = vpop.f32.mrf.mxu0
        %1990 = vmatprep.mubr.f32.mxu0 0.0
        %1991 = vmatmul.mubr.f32.gmra.mxu0 %v583
        %v1992 = vpop.f32.mrf.mxu0
        %v1993 = vadd.f32 0.0, %v1992
        %v1994 = vpop.f32.mrf.mxu0
        %1995 = vdwg.mxu0
        %v1996 = vmul.f32 %v430, %v1918
        %v1997 = vmul.f32 %v435, %v1923
        %v1998 = vmul.f32 %v440, %v1928
        %v1999 = vmul.f32 %v445, %v1933
        %v2000 = vmul.f32 %v450, %v1938
        %v2001 = vmul.f32 %v455, %v1943
        %v2002 = vmul.f32 %v460, %v1948
        %v2003 = vmul.f32 %v465, %v1953
        %v2004 = vmul.f32 %v470, %v1958
        %v2005 = vmul.f32 %v475, %v1963
        %v2006 = vmul.f32 %v480, %v1968
        %v2007 = vmul.f32 %v485, %v1973
        %v2008 = vmul.f32 %v490, %v1978
        %v2009 = vmul.f32 %v495, %v1983
        %v2010 = vmul.f32 %v500, %v1988
        %v2011 = vmul.f32 %v505, %v1993
        %v2012 = vadd.f32 %v1996, %v1997
        %v2013 = vadd.f32 %v2012, %v1998
        %v2014 = vadd.f32 %v2013, %v1999
        %v2015 = vadd.f32 %v2014, %v2000
        %v2016 = vadd.f32 %v2015, %v2001
        %v2017 = vadd.f32 %v2016, %v2002
        %v2018 = vadd.f32 %v2017, %v2003
        %v2019 = vadd.f32 %v2018, %v2004
        %v2020 = vadd.f32 %v2019, %v2005
        %v2021 = vadd.f32 %v2020, %v2006
        %v2022 = vadd.f32 %v2021, %v2007
        %v2023 = vadd.f32 %v2022, %v2008
        %v2024 = vadd.f32 %v2023, %v2009
        %v2025 = vadd.f32 %v2024, %v2010
        %v2026 = vadd.f32 %v2025, %v2011
        %v2027 = vrot.slane %v2026, 4
        %v2028 = vadd.f32 %v2026, %v2027
        %v2029 = vrot.slane %v2028, 2
        %v2030 = vadd.f32 %v2028, %v2029
        %v2031 = vrot.slane %v2030, 1
        %v2032 = vadd.f32 %v2030, %v2031
        %v2033 = vld [vmem:[%s243 + $0x6] sm:$0x1]
        %v2034 = vlaneseq
        %v2035 = vshrl.u32 %v2034, 7
        %v2036 = vsub.s32 0, %v2035
        %v2037 = vrot.slane %v2033, %v2036
        %vm2038 = vcmp.eq.s32.totalorder %v2037, %v245
        %vm2039 = vcmp.eq.s32.totalorder %v2037, %v246
        %vm2040 = vcmp.eq.s32.totalorder %v2037, %v247
        %vm2041 = vcmp.eq.s32.totalorder %v2037, %v248
        %vm2042 = vcmp.eq.s32.totalorder %v2037, %v249
        %vm2043 = vcmp.eq.s32.totalorder %v2037, %v250
        %vm2044 = vcmp.eq.s32.totalorder %v2037, %v251
        %vm2045 = vcmp.eq.s32.totalorder %v2037, %v252
        %v2046 = vsel %vm2038, 1, 0
        %v2047 = vsel %vm2039, 1, 0
        %v2048 = vsel %vm2040, 1, 0
        %v2049 = vsel %vm2041, 1, 0
        %v2050 = vsel %vm2042, 1, 0
        %v2051 = vsel %vm2043, 1, 0
        %v2052 = vsel %vm2044, 1, 0
        %v2053 = vsel %vm2045, 1, 0
        %v2054 = vcvt.s32.f32 %v2046
        %v2055 = vcvt.s32.f32 %v2047
        %v2056 = vcvt.s32.f32 %v2048
        %v2057 = vcvt.s32.f32 %v2049
        %v2058 = vcvt.s32.f32 %v2050
        %v2059 = vcvt.s32.f32 %v2051
        %v2060 = vcvt.s32.f32 %v2052
        %v2061 = vcvt.s32.f32 %v2053
        %2062 = vmatprep.subr.mxu0 0.0
        %2063 = vmatpush1.msra.mxu0 0.0
        %2064 = vmatprep.subr.mxu0 0.0
        %2065 = vmatpush1.msra.mxu0 0.0
        %2066 = vmatprep.subr.mxu0 0.0
        %2067 = vmatpush1.msra.mxu0 0.0
        %2068 = vmatprep.subr.mxu0 0.0
        %2069 = vmatpush1.msra.mxu0 0.0
        %2070 = vmatprep.subr.mxu0 0.0
        %2071 = vmatpush1.msra.mxu0 0.0
        %2072 = vmatprep.subr.mxu0 0.0
        %2073 = vmatpush1.msra.mxu0 0.0
        %2074 = vmatprep.subr.mxu0 0.0
        %2075 = vmatpush1.msra.mxu0 0.0
        %2076 = vmatprep.subr.mxu0 0.0
        %2077 = vmatpush1.msra.mxu0 0.0
        %2078 = vmatprep.subr.mxu0 0.0
        %2079 = vmatpush1.msra.mxu0 %v2061
        %2080 = vmatprep.subr.mxu0 0.0
        %2081 = vmatpush1.msra.mxu0 %v2060
        %2082 = vmatprep.subr.mxu0 0.0
        %2083 = vmatpush1.msra.mxu0 %v2059
        %2084 = vmatprep.subr.mxu0 0.0
        %2085 = vmatpush1.msra.mxu0 %v2058
        %2086 = vmatprep.subr.mxu0 0.0
        %2087 = vmatpush1.msra.mxu0 %v2057
        %2088 = vmatprep.subr.mxu0 0.0
        %2089 = vmatpush1.msra.mxu0 %v2056
        %2090 = vmatprep.subr.mxu0 0.0
        %2091 = vmatpush1.msra.mxu0 %v2055
        %2092 = vmatprep.subr.mxu0 0.0
        %2093 = vmatpush1.msra.mxu0 %v2054
        %2094 = vmatprep.subr.mxu0 0.0
        %2095 = vmatpush2.msra.mxu0 0.0
        %2096 = vmatprep.subr.mxu0 0.0
        %2097 = vmatpush2.msra.mxu0 0.0
        %2098 = vmatprep.subr.mxu0 0.0
        %2099 = vmatpush2.msra.mxu0 0.0
        %2100 = vmatprep.subr.mxu0 0.0
        %2101 = vmatpush2.msra.mxu0 0.0
        %2102 = vmatprep.subr.mxu0 0.0
        %2103 = vmatpush2.msra.mxu0 0.0
        %2104 = vmatprep.subr.mxu0 0.0
        %2105 = vmatpush2.msra.mxu0 0.0
        %2106 = vmatprep.subr.mxu0 0.0
        %2107 = vmatpush2.msra.mxu0 0.0
        %2108 = vmatprep.subr.mxu0 0.0
        %2109 = vmatpush2.msra.mxu0 0.0
        %2110 = vmatprep.subr.mxu0 0.0
        %2111 = vmatpush2.msra.mxu0 0.0
        %2112 = vmatprep.subr.mxu0 0.0
        %2113 = vmatpush2.msra.mxu0 0.0
        %2114 = vmatprep.subr.mxu0 0.0
        %2115 = vmatpush2.msra.mxu0 0.0
        %2116 = vmatprep.subr.mxu0 0.0
        %2117 = vmatpush2.msra.mxu0 0.0
        %2118 = vmatprep.subr.mxu0 0.0
        %2119 = vmatpush2.msra.mxu0 0.0
        %2120 = vmatprep.subr.mxu0 0.0
        %2121 = vmatpush2.msra.mxu0 0.0
        %2122 = vmatprep.subr.mxu0 0.0
        %2123 = vmatpush2.msra.mxu0 0.0
        %2124 = vmatprep.subr.mxu0 0.0
        %2125 = vmatpush2.msra.mxu0 0.0
        %2126 = vmatprep.mubr.f32.mxu0 0.0
        %2127 = vmatmul.mubr.f32.gmra.mxu0 %v538
        %v2128 = vpop.f32.mrf.mxu0
        %v2129 = vadd.f32 0.0, %v2128
        %v2130 = vpop.f32.mrf.mxu0
        %2131 = vmatprep.mubr.f32.mxu0 0.0
        %2132 = vmatmul.mubr.f32.gmra.mxu0 %v541
        %v2133 = vpop.f32.mrf.mxu0
        %v2134 = vadd.f32 0.0, %v2133
        %v2135 = vpop.f32.mrf.mxu0
        %2136 = vmatprep.mubr.f32.mxu0 0.0
        %2137 = vmatmul.mubr.f32.gmra.mxu0 %v544
        %v2138 = vpop.f32.mrf.mxu0
        %v2139 = vadd.f32 0.0, %v2138
        %v2140 = vpop.f32.mrf.mxu0
        %2141 = vmatprep.mubr.f32.mxu0 0.0
        %2142 = vmatmul.mubr.f32.gmra.mxu0 %v547
        %v2143 = vpop.f32.mrf.mxu0
        %v2144 = vadd.f32 0.0, %v2143
        %v2145 = vpop.f32.mrf.mxu0
        %2146 = vmatprep.mubr.f32.mxu0 0.0
        %2147 = vmatmul.mubr.f32.gmra.mxu0 %v550
        %v2148 = vpop.f32.mrf.mxu0
        %v2149 = vadd.f32 0.0, %v2148
        %v2150 = vpop.f32.mrf.mxu0
        %2151 = vmatprep.mubr.f32.mxu0 0.0
        %2152 = vmatmul.mubr.f32.gmra.mxu0 %v553
        %v2153 = vpop.f32.mrf.mxu0
        %v2154 = vadd.f32 0.0, %v2153
        %v2155 = vpop.f32.mrf.mxu0
        %2156 = vmatprep.mubr.f32.mxu0 0.0
        %2157 = vmatmul.mubr.f32.gmra.mxu0 %v556
        %v2158 = vpop.f32.mrf.mxu0
        %v2159 = vadd.f32 0.0, %v2158
        %v2160 = vpop.f32.mrf.mxu0
        %2161 = vmatprep.mubr.f32.mxu0 0.0
        %2162 = vmatmul.mubr.f32.gmra.mxu0 %v559
        %v2163 = vpop.f32.mrf.mxu0
        %v2164 = vadd.f32 0.0, %v2163
        %v2165 = vpop.f32.mrf.mxu0
        %2166 = vmatprep.mubr.f32.mxu0 0.0
        %2167 = vmatmul.mubr.f32.gmra.mxu0 %v562
        %v2168 = vpop.f32.mrf.mxu0
        %v2169 = vadd.f32 0.0, %v2168
        %v2170 = vpop.f32.mrf.mxu0
        %2171 = vmatprep.mubr.f32.mxu0 0.0
        %2172 = vmatmul.mubr.f32.gmra.mxu0 %v565
        %v2173 = vpop.f32.mrf.mxu0
        %v2174 = vadd.f32 0.0, %v2173
        %v2175 = vpop.f32.mrf.mxu0
        %2176 = vmatprep.mubr.f32.mxu0 0.0
        %2177 = vmatmul.mubr.f32.gmra.mxu0 %v568
        %v2178 = vpop.f32.mrf.mxu0
        %v2179 = vadd.f32 0.0, %v2178
        %v2180 = vpop.f32.mrf.mxu0
        %2181 = vmatprep.mubr.f32.mxu0 0.0
        %2182 = vmatmul.mubr.f32.gmra.mxu0 %v571
        %v2183 = vpop.f32.mrf.mxu0
        %v2184 = vadd.f32 0.0, %v2183
        %v2185 = vpop.f32.mrf.mxu0
        %2186 = vmatprep.mubr.f32.mxu0 0.0
        %2187 = vmatmul.mubr.f32.gmra.mxu0 %v574
        %v2188 = vpop.f32.mrf.mxu0
        %v2189 = vadd.f32 0.0, %v2188
        %v2190 = vpop.f32.mrf.mxu0
        %2191 = vmatprep.mubr.f32.mxu0 0.0
        %2192 = vmatmul.mubr.f32.gmra.mxu0 %v577
        %v2193 = vpop.f32.mrf.mxu0
        %v2194 = vadd.f32 0.0, %v2193
        %v2195 = vpop.f32.mrf.mxu0
        %2196 = vmatprep.mubr.f32.mxu0 0.0
        %2197 = vmatmul.mubr.f32.gmra.mxu0 %v580
        %v2198 = vpop.f32.mrf.mxu0
        %v2199 = vadd.f32 0.0, %v2198
        %v2200 = vpop.f32.mrf.mxu0
        %2201 = vmatprep.mubr.f32.mxu0 0.0
        %2202 = vmatmul.mubr.f32.gmra.mxu0 %v583
        %v2203 = vpop.f32.mrf.mxu0
        %v2204 = vadd.f32 0.0, %v2203
        %v2205 = vpop.f32.mrf.mxu0
        %2206 = vdwg.mxu0
        %v2207 = vmul.f32 %v430, %v2129
        %v2208 = vmul.f32 %v435, %v2134
        %v2209 = vmul.f32 %v440, %v2139
        %v2210 = vmul.f32 %v445, %v2144
        %v2211 = vmul.f32 %v450, %v2149
        %v2212 = vmul.f32 %v455, %v2154
        %v2213 = vmul.f32 %v460, %v2159
        %v2214 = vmul.f32 %v465, %v2164
        %v2215 = vmul.f32 %v470, %v2169
        %v2216 = vmul.f32 %v475, %v2174
        %v2217 = vmul.f32 %v480, %v2179
        %v2218 = vmul.f32 %v485, %v2184
        %v2219 = vmul.f32 %v490, %v2189
        %v2220 = vmul.f32 %v495, %v2194
        %v2221 = vmul.f32 %v500, %v2199
        %v2222 = vmul.f32 %v505, %v2204
        %v2223 = vadd.f32 %v2207, %v2208
        %v2224 = vadd.f32 %v2223, %v2209
        %v2225 = vadd.f32 %v2224, %v2210
        %v2226 = vadd.f32 %v2225, %v2211
        %v2227 = vadd.f32 %v2226, %v2212
        %v2228 = vadd.f32 %v2227, %v2213
        %v2229 = vadd.f32 %v2228, %v2214
        %v2230 = vadd.f32 %v2229, %v2215
        %v2231 = vadd.f32 %v2230, %v2216
        %v2232 = vadd.f32 %v2231, %v2217
        %v2233 = vadd.f32 %v2232, %v2218
        %v2234 = vadd.f32 %v2233, %v2219
        %v2235 = vadd.f32 %v2234, %v2220
        %v2236 = vadd.f32 %v2235, %v2221
        %v2237 = vadd.f32 %v2236, %v2222
        %v2238 = vrot.slane %v2237, 4
        %v2239 = vadd.f32 %v2237, %v2238
        %v2240 = vrot.slane %v2239, 2
        %v2241 = vadd.f32 %v2239, %v2240
        %v2242 = vrot.slane %v2241, 1
        %v2243 = vadd.f32 %v2241, %v2242
        %v2244 = vld [vmem:[%s243 + $0x7] sm:$0x1]
        %v2245 = vlaneseq
        %v2246 = vshrl.u32 %v2245, 7
        %v2247 = vsub.s32 0, %v2246
        %v2248 = vrot.slane %v2244, %v2247
        %vm2249 = vcmp.eq.s32.totalorder %v2248, %v245
        %vm2250 = vcmp.eq.s32.totalorder %v2248, %v246
        %vm2251 = vcmp.eq.s32.totalorder %v2248, %v247
        %vm2252 = vcmp.eq.s32.totalorder %v2248, %v248
        %vm2253 = vcmp.eq.s32.totalorder %v2248, %v249
        %vm2254 = vcmp.eq.s32.totalorder %v2248, %v250
        %vm2255 = vcmp.eq.s32.totalorder %v2248, %v251
        %vm2256 = vcmp.eq.s32.totalorder %v2248, %v252
        %v2257 = vsel %vm2249, 1, 0
        %v2258 = vsel %vm2250, 1, 0
        %v2259 = vsel %vm2251, 1, 0
        %v2260 = vsel %vm2252, 1, 0
        %v2261 = vsel %vm2253, 1, 0
        %v2262 = vsel %vm2254, 1, 0
        %v2263 = vsel %vm2255, 1, 0
        %v2264 = vsel %vm2256, 1, 0
        %v2265 = vcvt.s32.f32 %v2257
        %v2266 = vcvt.s32.f32 %v2258
        %v2267 = vcvt.s32.f32 %v2259
        %v2268 = vcvt.s32.f32 %v2260
        %v2269 = vcvt.s32.f32 %v2261
        %v2270 = vcvt.s32.f32 %v2262
        %v2271 = vcvt.s32.f32 %v2263
        %v2272 = vcvt.s32.f32 %v2264
        %2273 = vmatprep.subr.mxu0 0.0
        %2274 = vmatpush1.msra.mxu0 0.0
        %2275 = vmatprep.subr.mxu0 0.0
        %2276 = vmatpush1.msra.mxu0 0.0
        %2277 = vmatprep.subr.mxu0 0.0
        %2278 = vmatpush1.msra.mxu0 0.0
        %2279 = vmatprep.subr.mxu0 0.0
        %2280 = vmatpush1.msra.mxu0 0.0
        %2281 = vmatprep.subr.mxu0 0.0
        %2282 = vmatpush1.msra.mxu0 0.0
        %2283 = vmatprep.subr.mxu0 0.0
        %2284 = vmatpush1.msra.mxu0 0.0
        %2285 = vmatprep.subr.mxu0 0.0
        %2286 = vmatpush1.msra.mxu0 0.0
        %2287 = vmatprep.subr.mxu0 0.0
        %2288 = vmatpush1.msra.mxu0 0.0
        %2289 = vmatprep.subr.mxu0 0.0
        %2290 = vmatpush1.msra.mxu0 %v2272
        %2291 = vmatprep.subr.mxu0 0.0
        %2292 = vmatpush1.msra.mxu0 %v2271
        %2293 = vmatprep.subr.mxu0 0.0
        %2294 = vmatpush1.msra.mxu0 %v2270
        %2295 = vmatprep.subr.mxu0 0.0
        %2296 = vmatpush1.msra.mxu0 %v2269
        %2297 = vmatprep.subr.mxu0 0.0
        %2298 = vmatpush1.msra.mxu0 %v2268
        %2299 = vmatprep.subr.mxu0 0.0
        %2300 = vmatpush1.msra.mxu0 %v2267
        %2301 = vmatprep.subr.mxu0 0.0
        %2302 = vmatpush1.msra.mxu0 %v2266
        %2303 = vmatprep.subr.mxu0 0.0
        %2304 = vmatpush1.msra.mxu0 %v2265
        %2305 = vmatprep.subr.mxu0 0.0
        %2306 = vmatpush2.msra.mxu0 0.0
        %2307 = vmatprep.subr.mxu0 0.0
        %2308 = vmatpush2.msra.mxu0 0.0
        %2309 = vmatprep.subr.mxu0 0.0
        %2310 = vmatpush2.msra.mxu0 0.0
        %2311 = vmatprep.subr.mxu0 0.0
        %2312 = vmatpush2.msra.mxu0 0.0
        %2313 = vmatprep.subr.mxu0 0.0
        %2314 = vmatpush2.msra.mxu0 0.0
        %2315 = vmatprep.subr.mxu0 0.0
        %2316 = vmatpush2.msra.mxu0 0.0
        %2317 = vmatprep.subr.mxu0 0.0
        %2318 = vmatpush2.msra.mxu0 0.0
        %2319 = vmatprep.subr.mxu0 0.0
        %2320 = vmatpush2.msra.mxu0 0.0
        %2321 = vmatprep.subr.mxu0 0.0
        %2322 = vmatpush2.msra.mxu0 0.0
        %2323 = vmatprep.subr.mxu0 0.0
        %2324 = vmatpush2.msra.mxu0 0.0
        %2325 = vmatprep.subr.mxu0 0.0
        %2326 = vmatpush2.msra.mxu0 0.0
        %2327 = vmatprep.subr.mxu0 0.0
        %2328 = vmatpush2.msra.mxu0 0.0
        %2329 = vmatprep.subr.mxu0 0.0
        %2330 = vmatpush2.msra.mxu0 0.0
        %2331 = vmatprep.subr.mxu0 0.0
        %2332 = vmatpush2.msra.mxu0 0.0
        %2333 = vmatprep.subr.mxu0 0.0
        %2334 = vmatpush2.msra.mxu0 0.0
        %2335 = vmatprep.subr.mxu0 0.0
        %2336 = vmatpush2.msra.mxu0 0.0
        %2337 = vmatprep.mubr.f32.mxu0 0.0
        %2338 = vmatmul.mubr.f32.gmra.mxu0 %v538
        %v2339 = vpop.f32.mrf.mxu0
        %v2340 = vadd.f32 0.0, %v2339
        %v2341 = vpop.f32.mrf.mxu0
        %2342 = vmatprep.mubr.f32.mxu0 0.0
        %2343 = vmatmul.mubr.f32.gmra.mxu0 %v541
        %v2344 = vpop.f32.mrf.mxu0
        %v2345 = vadd.f32 0.0, %v2344
        %v2346 = vpop.f32.mrf.mxu0
        %2347 = vmatprep.mubr.f32.mxu0 0.0
        %2348 = vmatmul.mubr.f32.gmra.mxu0 %v544
        %v2349 = vpop.f32.mrf.mxu0
        %v2350 = vadd.f32 0.0, %v2349
        %v2351 = vpop.f32.mrf.mxu0
        %2352 = vmatprep.mubr.f32.mxu0 0.0
        %2353 = vmatmul.mubr.f32.gmra.mxu0 %v547
        %v2354 = vpop.f32.mrf.mxu0
        %v2355 = vadd.f32 0.0, %v2354
        %v2356 = vpop.f32.mrf.mxu0
        %2357 = vmatprep.mubr.f32.mxu0 0.0
        %2358 = vmatmul.mubr.f32.gmra.mxu0 %v550
        %v2359 = vpop.f32.mrf.mxu0
        %v2360 = vadd.f32 0.0, %v2359
        %v2361 = vpop.f32.mrf.mxu0
        %2362 = vmatprep.mubr.f32.mxu0 0.0
        %2363 = vmatmul.mubr.f32.gmra.mxu0 %v553
        %v2364 = vpop.f32.mrf.mxu0
        %v2365 = vadd.f32 0.0, %v2364
        %v2366 = vpop.f32.mrf.mxu0
        %2367 = vmatprep.mubr.f32.mxu0 0.0
        %2368 = vmatmul.mubr.f32.gmra.mxu0 %v556
        %v2369 = vpop.f32.mrf.mxu0
        %v2370 = vadd.f32 0.0, %v2369
        %v2371 = vpop.f32.mrf.mxu0
        %2372 = vmatprep.mubr.f32.mxu0 0.0
        %2373 = vmatmul.mubr.f32.gmra.mxu0 %v559
        %v2374 = vpop.f32.mrf.mxu0
        %v2375 = vadd.f32 0.0, %v2374
        %v2376 = vpop.f32.mrf.mxu0
        %2377 = vmatprep.mubr.f32.mxu0 0.0
        %2378 = vmatmul.mubr.f32.gmra.mxu0 %v562
        %v2379 = vpop.f32.mrf.mxu0
        %v2380 = vadd.f32 0.0, %v2379
        %v2381 = vpop.f32.mrf.mxu0
        %2382 = vmatprep.mubr.f32.mxu0 0.0
        %2383 = vmatmul.mubr.f32.gmra.mxu0 %v565
        %v2384 = vpop.f32.mrf.mxu0
        %v2385 = vadd.f32 0.0, %v2384
        %v2386 = vpop.f32.mrf.mxu0
        %2387 = vmatprep.mubr.f32.mxu0 0.0
        %2388 = vmatmul.mubr.f32.gmra.mxu0 %v568
        %v2389 = vpop.f32.mrf.mxu0
        %v2390 = vadd.f32 0.0, %v2389
        %v2391 = vpop.f32.mrf.mxu0
        %2392 = vmatprep.mubr.f32.mxu0 0.0
        %2393 = vmatmul.mubr.f32.gmra.mxu0 %v571
        %v2394 = vpop.f32.mrf.mxu0
        %v2395 = vadd.f32 0.0, %v2394
        %v2396 = vpop.f32.mrf.mxu0
        %2397 = vmatprep.mubr.f32.mxu0 0.0
        %2398 = vmatmul.mubr.f32.gmra.mxu0 %v574
        %v2399 = vpop.f32.mrf.mxu0
        %v2400 = vadd.f32 0.0, %v2399
        %v2401 = vpop.f32.mrf.mxu0
        %2402 = vmatprep.mubr.f32.mxu0 0.0
        %2403 = vmatmul.mubr.f32.gmra.mxu0 %v577
        %v2404 = vpop.f32.mrf.mxu0
        %v2405 = vadd.f32 0.0, %v2404
        %v2406 = vpop.f32.mrf.mxu0
        %2407 = vmatprep.mubr.f32.mxu0 0.0
        %2408 = vmatmul.mubr.f32.gmra.mxu0 %v580
        %v2409 = vpop.f32.mrf.mxu0
        %v2410 = vadd.f32 0.0, %v2409
        %v2411 = vpop.f32.mrf.mxu0
        %2412 = vmatprep.mubr.f32.mxu0 0.0
        %2413 = vmatmul.mubr.f32.gmra.mxu0 %v583
        %v2414 = vpop.f32.mrf.mxu0
        %v2415 = vadd.f32 0.0, %v2414
        %v2416 = vpop.f32.mrf.mxu0
        %2417 = vdwg.mxu0
        %v2418 = vmul.f32 %v430, %v2340
        %v2419 = vmul.f32 %v435, %v2345
        %v2420 = vmul.f32 %v440, %v2350
        %v2421 = vmul.f32 %v445, %v2355
        %v2422 = vmul.f32 %v450, %v2360
        %v2423 = vmul.f32 %v455, %v2365
        %v2424 = vmul.f32 %v460, %v2370
        %v2425 = vmul.f32 %v465, %v2375
        %v2426 = vmul.f32 %v470, %v2380
        %v2427 = vmul.f32 %v475, %v2385
        %v2428 = vmul.f32 %v480, %v2390
        %v2429 = vmul.f32 %v485, %v2395
        %v2430 = vmul.f32 %v490, %v2400
        %v2431 = vmul.f32 %v495, %v2405
        %v2432 = vmul.f32 %v500, %v2410
        %v2433 = vmul.f32 %v505, %v2415
        %v2434 = vadd.f32 %v2418, %v2419
        %v2435 = vadd.f32 %v2434, %v2420
        %v2436 = vadd.f32 %v2435, %v2421
        %v2437 = vadd.f32 %v2436, %v2422
        %v2438 = vadd.f32 %v2437, %v2423
        %v2439 = vadd.f32 %v2438, %v2424
        %v2440 = vadd.f32 %v2439, %v2425
        %v2441 = vadd.f32 %v2440, %v2426
        %v2442 = vadd.f32 %v2441, %v2427
        %v2443 = vadd.f32 %v2442, %v2428
        %v2444 = vadd.f32 %v2443, %v2429
        %v2445 = vadd.f32 %v2444, %v2430
        %v2446 = vadd.f32 %v2445, %v2431
        %v2447 = vadd.f32 %v2446, %v2432
        %v2448 = vadd.f32 %v2447, %v2433
        %v2449 = vrot.slane %v2448, 4
        %v2450 = vadd.f32 %v2448, %v2449
        %v2451 = vrot.slane %v2450, 2
        %v2452 = vadd.f32 %v2450, %v2451
        %v2453 = vrot.slane %v2452, 1
        %v2454 = vadd.f32 %v2452, %v2453
        %vm2455 = vcmask 1040384
        %v2456 = vsel %vm2455, %v766, %v977
        %vm2457 = vcmask 1041408
        %v2458 = vsel %vm2457, %v2456, %v1188
        %vm2459 = vcmask 1042432
        %v2460 = vsel %vm2459, %v2458, %v1399
        %vm2461 = vcmask 1043456
        %v2462 = vsel %vm2461, %v2460, %v1610
        %vm2463 = vcmask 1044480
        %v2464 = vsel %vm2463, %v2462, %v1821
        %vm2465 = vcmask 1045504
        %v2466 = vsel %vm2465, %v2464, %v2032
        %vm2467 = vcmask 1046528
        %v2468 = vsel %vm2467, %v2466, %v2243
        %2469 = vst [vmem:[%s233] sm:$0xff] %v2468
        %2470 = vst [vmem:[%s233 + $0x8] sm:$0x1] %v2454
        %s2471 = sand.u32 %s144, 1
        %s2472 = sand.u32 %s144, 1
        %s2473 = smul.addr %s2472, 16
        %s2474 = scalar_lea.vmem [#allocation2], %s2473
        // Predicated region
        $region41: #{skipgram_forward.1} parent=39 // pred_check
          %p2475 = pneg %p154
        $region42: #{skipgram_forward.1} parent=39 // pred_check_branch
          %2477 = sbr.rel (%p2475) target = $region44
        $region43: #{skipgram_forward.1} parent=39 // pred_region
          %s2478 = smul.addr %s16, 8
          %s2479 = scalar_lea.vmem %s5, %s2478
          // Predicated region
          $region45: #{skipgram_forward.1} parent=43 // pred_check
            _
          $region46: #{skipgram_forward.1} parent=43 // pred_check_branch
            %2481 = sbr.rel (0) target = $region48
          $region47: #{skipgram_forward.1} parent=43 // pred_region
            // Predicated region
            $region49: #{skipgram_forward.1} parent=47 // pred_check
              _
            $region50: #{skipgram_forward.1} parent=47 // pred_check_branch
              %2483 = sbr.rel (0) target = $region52
            $region51: #{skipgram_forward.1} parent=47 // pred_region
              // Predicated region
              $region64: #{skipgram_forward.1} parent=51 // pred_check
                _
              $region65: #{skipgram_forward.1} parent=51 // pred_check_branch
                %2501 = sbr.rel (0) target = $region67
              $region66: #{skipgram_forward.1} parent=51 // pred_region
                loop: start=0, step=1, limit=1
                $region68: #{skipgram_forward.1} parent=66 // loop_pre_header
                  _
                $region69: #{skipgram_forward.1} parent=66 // loop_header
                  %s2503 = sphi 0, %s2507
                  %p2504 = scmp.ge.s32.totalorder %s2503, 1
                  %s2508 = sphi %s2474, %s2474
                  %s2509 = sphi %s2479, %s2479
                $region70: #{skipgram_forward.1} parent=66 // loop_header_branch
                  %2506 = sbr.rel (%p2504) target = $region74
                $region71: #{skipgram_forward.1} parent=66 // loop_body
                  %v2510 = vld [vmem:[%s2508] sm:$0xff]
                  %2511 = vst [vmem:[%s2509] sm:$0xff] %v2510
                  %v2512 = vld [vmem:[%s2508 + $0x8] sm:$0xff]
                  %2513 = vst [vmem:[%s2509 + $0x10] sm:$0xff] %v2512
                $region72: #{skipgram_forward.1} parent=66 // loop_footer
                  %s2507 = sadd.s32 1, %s2503
                $region73: #{skipgram_forward.1} parent=66 // loop_footer_branch
                  %2502 = sbr.rel target = $region69
                $region74: #{skipgram_forward.1} parent=66 // loop_exit
                  _
              $region67: #{skipgram_forward.1} parent=51 // pred_fallthru
                _
              // Predicated region
              $region75: #{skipgram_forward.1} parent=51 // pred_check
                _
              $region76: #{skipgram_forward.1} parent=51 // pred_check_branch
                %2515 = sbr.rel target = $region78
              $region77: #{skipgram_forward.1} parent=51 // pred_region
                _
              $region78: #{skipgram_forward.1} parent=51 // pred_fallthru
                _
            $region52: #{skipgram_forward.1} parent=47 // pred_fallthru
              _
            // Predicated region
            $region53: #{skipgram_forward.1} parent=47 // pred_check
              _
            $region54: #{skipgram_forward.1} parent=47 // pred_check_branch
              %2485 = sbr.rel target = $region56
            $region55: #{skipgram_forward.1} parent=47 // pred_region
              %s2487 = ssub.s32 256, 1
              loop: start=0, step=1, limit=1
              $region57: #{skipgram_forward.1} parent=55 // loop_pre_header
                _
              $region58: #{skipgram_forward.1} parent=55 // loop_header
                %s2489 = sphi 0, %s2493
                %p2490 = scmp.ge.s32.totalorder %s2489, 1
                %s2494 = sphi %s2474, %s2474
                %s2495 = sphi %s2479, %s2479
              $region59: #{skipgram_forward.1} parent=55 // loop_header_branch
                %2492 = sbr.rel (%p2490) target = $region63
              $region60: #{skipgram_forward.1} parent=55 // loop_body
                %v2496 = vld [vmem:[%s2494] sm:%s2487]
                %2497 = vst [vmem:[%s2495] sm:%s2487] %v2496
                %v2498 = vld [vmem:[%s2494 + $0x8] sm:%s2487]
                %2499 = vst [vmem:[%s2495 + $0x10] sm:%s2487] %v2498
              $region61: #{skipgram_forward.1} parent=55 // loop_footer
                %s2493 = sadd.s32 1, %s2489
              $region62: #{skipgram_forward.1} parent=55 // loop_footer_branch
                %2488 = sbr.rel target = $region58
              $region63: #{skipgram_forward.1} parent=55 // loop_exit
                _
            $region56: #{skipgram_forward.1} parent=47 // pred_fallthru
              _
          $region48: #{skipgram_forward.1} parent=43 // pred_fallthru
            _
          %2516 = vnop
        $region44: #{skipgram_forward.1} parent=39 // pred_fallthru
          _
      $region40: #{skipgram_forward.1} parent=5 // pred_fallthru
        _
      %p2517 = scmp.le.s32.totalorder 2, %s11
      // Predicated region
      $region79: #{skipgram_forward.1} parent=5 // pred_check
        %p2518 = pneg %p2517
      $region80: #{skipgram_forward.1} parent=5 // pred_check_branch
        %2520 = sbr.rel (%p2518) target = $region82
      $region81: #{skipgram_forward.1} parent=5 // pred_region
        %s2521 = ssub.s32 %s11, 2
        // Predicated region
        $region83: #{skipgram_forward.1} parent=81 // pred_check
          %p2522 = pneg %p160
        $region84: #{skipgram_forward.1} parent=81 // pred_check_branch
          %2524 = sbr.rel (%p2522) target = $region86
        $region85: #{skipgram_forward.1} parent=81 // pred_region
          %s2525 = sand.u32 %s145, 1
          %s2526 = sand.u32 %s145, 1
          %s2527 = smul.addr %s2526, 16
          %s2528 = scalar_lea.vmem [#allocation2], %s2527
        $region86: #{skipgram_forward.1} parent=81 // pred_fallthru
          _
      $region82: #{skipgram_forward.1} parent=5 // pred_fallthru
        _
    $region6: #{skipgram_forward.1} parent=1 // loop_footer
      %s15 = sadd.s32 1, %s11
    $region7: #{skipgram_forward.1} parent=1 // loop_footer_branch
      %10 = sbr.rel target = $region3
    $region8: #{skipgram_forward.1} parent=1 // loop_exit
      _

</llo_original>
